<compile_context>
chip_gen: v6e
topology: v6e:2x2x1
jax: 0.10.0
libtpu: 0.0.40
codegen_flags: <defaults>
</compile_context>

<pallas_src>
import numpy as np
import jax
import jax.numpy as jnp
from jax import lax
from jax.experimental import pallas as pl
from jax.experimental.pallas import tpu as pltpu

# ----------------------- small, self-consistent Mamba2 config ------------------
HIDDEN       = 32                          # config.hidden_size
EXPAND       = 2
INTERMEDIATE = EXPAND * HIDDEN             # 64
NUM_HEADS    = 4
HEAD_DIM     = INTERMEDIATE // NUM_HEADS   # 16
SSM_STATE    = 16                          # config.state_size
N_GROUPS     = 1
CONV_K       = 4                           # config.conv_kernel
CONV_DIM     = INTERMEDIATE + 2 * N_GROUPS * SSM_STATE          # 96
PROJ         = INTERMEDIATE + CONV_DIM + NUM_HEADS              # 164
RMS_EPS      = 1e-5                        # config.layer_norm_epsilon
BATCH        = 2
SEQ          = 16                          # <= chunk_size (single SSD chunk)
BL           = BATCH * SEQ                 # 32  (merged batch*seq rows)

# lane-aligned padded in_proj column layout: [gate | dt | pad | hid,B,C | pad] -> 256 cols
GATE_OFF = 0
DT_OFF   = INTERMEDIATE                    # 64 (same vreg as gate, no straddle)
HBC_OFF  = 128                             # hid|B|C starts on a 128-lane boundary
PROJ_PAD = 256

# ----------------------- packed constant-slab row layout (f32, 128 lanes) ------
R_VEC      = 0     # rows 0..5: norm_w | conv_b | dt_bias | -exp(A_log) | D_expanded | gated_w
R_CONVW    = 8     # [4, 96]   depthwise conv weights
R_HEADCOLS = 16    # [4, 128]  head -> (head block of nh*BL columns) indicator
R_HEADEXP  = 24    # [4, 64]   head -> intermediate-lane indicator
R_TRILF    = 32    # [32, 32]  per-batch block-diagonal lower-tri (f32)
R_MASKF    = 64    # [32, 128] tril tiled across head blocks (select mask)
R_COLMASK  = 96    # [32, 128] trilᵀ tiled across head blocks (column cumsum mask)
R_SHIFTS   = 128   # [96, 32]  stacked causal shift matrices (shift 1, 2, 3)
R_XBDSEL   = 224   # [128, 64] block-diagonal selector for the fused y matmul rhs
R_OUTW     = 352   # [64, 32]  out_proj weight
CONST_ROWS = 416


def mamba2_block_kernel(hs_ref, inw_ref, cst_ref, out_ref):
    # One invocation processes the whole (batch, seq) slab as [B*L, H].
    x = hs_ref[...].astype(jnp.float32)                  # [BL, H]
    residual = x                                         # residual_in_fp32 = True

    # ---------- parameters / constants: static slices of the single packed slab ----------
    norm_w  = cst_ref[R_VEC + 0:R_VEC + 1, 0:HIDDEN]                      # [1, H]
    conv_b  = cst_ref[R_VEC + 1:R_VEC + 2, 0:CONV_DIM]                    # [1, 96]
    dt_b    = cst_ref[R_VEC + 2:R_VEC + 3, 0:NUM_HEADS]                   # [1, 4]
    neg_a   = cst_ref[R_VEC + 3:R_VEC + 4, 0:NUM_HEADS]                   # [1, 4]  (= -exp(A_log))
    d_exp   = cst_ref[R_VEC + 4:R_VEC + 5, 0:INTERMEDIATE]                # [1, 64]
    gw      = cst_ref[R_VEC + 5:R_VEC + 6, 0:INTERMEDIATE]                # [1, 64]
    convw   = cst_ref[R_CONVW:R_CONVW + CONV_K, 0:CONV_DIM]               # [4, 96]
    headcol = cst_ref[R_HEADCOLS:R_HEADCOLS + NUM_HEADS, :]               # [4, 128]
    headexp = cst_ref[R_HEADEXP:R_HEADEXP + NUM_HEADS, 0:INTERMEDIATE]    # [4, 64]
    trilf   = cst_ref[R_TRILF:R_TRILF + BL, 0:BL]                         # [32, 32]
    maskf   = cst_ref[R_MASKF:R_MASKF + BL, :]                            # [32, 128]
    colmask = cst_ref[R_COLMASK:R_COLMASK + BL, :]                        # [32, 128]
    shifts  = cst_ref[R_SHIFTS:R_SHIFTS + (CONV_K - 1) * BL, 0:BL]        # [96, 32]
    xbdsel  = cst_ref[R_XBDSEL:R_XBDSEL + NUM_HEADS * BL, 0:INTERMEDIATE] # [128, 64]
    outw    = cst_ref[R_OUTW:R_OUTW + INTERMEDIATE, 0:HIDDEN]             # [64, 32]

    # ------------------ Mamba2RMSNorm (pre-norm) ------------------
    var = jnp.mean(x * x, axis=-1, keepdims=True)
    xn = norm_w * (x * lax.rsqrt(var + RMS_EPS))

    # ------------------ in_proj (bf16 MXU operands, f32 accumulate) ------------------
    proj = jnp.dot(xn.astype(jnp.bfloat16), inw_ref[...],
                   preferred_element_type=jnp.float32)                    # [BL, 256]
    gate   = proj[:, GATE_OFF:GATE_OFF + INTERMEDIATE]                    # [BL, I]
    dt_raw = proj[:, DT_OFF:DT_OFF + NUM_HEADS]                           # [BL, nh]
    hbc    = proj[:, HBC_OFF:HBC_OFF + CONV_DIM]                          # [BL, conv_dim]

    # ------------------ depthwise causal conv1d + SiLU ------------------
    # History taps via one host-baked stacked shift matmul (per-batch causality baked in).
    z = jnp.dot(shifts, hbc, preferred_element_type=jnp.float32)          # [3*BL, conv_dim]
    acc = (hbc * convw[CONV_K - 1:CONV_K, :]
           + z[0:BL, :]          * convw[CONV_K - 2:CONV_K - 1, :]        # shift 1
           + z[BL:2 * BL, :]     * convw[CONV_K - 3:CONV_K - 2, :]        # shift 2
           + z[2 * BL:3 * BL, :] * convw[0:1, :]                          # shift 3
           + conv_b)
    hbc_act = acc * jax.nn.sigmoid(acc)                                   # SiLU

    hid   = hbc_act[:, 0:INTERMEDIATE]                                    # [BL, I]
    b_all = hbc_act[:, INTERMEDIATE:INTERMEDIATE + SSM_STATE]             # [BL, N] (n_groups == 1)
    c_all = hbc_act[:, INTERMEDIATE + SSM_STATE:CONV_DIM]                 # [BL, N]

    # ------------------ dt / A (exponent path kept in f32) ------------------
    dt = jax.nn.softplus(dt_raw + dt_b)                                   # [BL, nh]
    # TODO(synk): time_step_limit clamp omitted — default (0.0, inf) is a no-op after softplus.
    adt = dt * neg_a                                                      # [BL, nh]  (A*dt)

    # Fused per-head decay: one [BL, nh*BL] build instead of a per-head loop.
    adt_big   = jnp.dot(adt, headcol, preferred_element_type=jnp.float32)   # [BL, 128]
    acum_rows = jnp.dot(trilf, adt_big, preferred_element_type=jnp.float32) # [BL, 128] acum[t,h]
    acum_cols = jnp.sum(colmask * adt_big, axis=0, keepdims=True)           # [1, 128]  acum[s,h]
    mask  = maskf > 0.5                                                     # block-diag causal
    decay = jnp.exp(jnp.where(mask, acum_rows - acum_cols, 0.0))            # [BL, 128]

    # shared C·Bᵀ (n_groups == 1), tiled across head blocks, masked with a SELECT.
    gmat = lax.dot_general(c_all.astype(jnp.bfloat16), b_all.astype(jnp.bfloat16),
                           (((1,), (1,)), ((), ())),
                           preferred_element_type=jnp.float32)              # [BL, BL]
    gbig = jnp.concatenate([gmat] * NUM_HEADS, axis=1)                      # [BL, 128]
    m_big = jnp.where(mask, gbig * decay, 0.0)                              # [BL, nh*BL]

    # Fused per-head y matmul:  y = M_big @ block-diagonal(dt_s * x_s)
    xdt  = hid * jnp.dot(dt, headexp, preferred_element_type=jnp.float32)   # [BL, I]
    x_bd = xbdsel * jnp.concatenate([xdt] * NUM_HEADS, axis=0)              # [nh*BL, I]
    y = jnp.dot(m_big.astype(jnp.bfloat16), x_bd.astype(jnp.bfloat16),
                preferred_element_type=jnp.float32)                         # [BL, I]
    y = y + d_exp * hid                                                     # + D skip (per head)

    # ------------------ gated RMSNorm (MambaRMSNormGated) ------------------
    yg = y * (gate * jax.nn.sigmoid(gate))
    var2 = jnp.mean(yg * yg, axis=-1, keepdims=True)
    yn = gw * (yg * lax.rsqrt(var2 + RMS_EPS))

    # ------------------ out_proj + residual ------------------
    out = jnp.dot(yn.astype(jnp.bfloat16), outw.astype(jnp.bfloat16),
                  preferred_element_type=jnp.float32)                       # [BL, H]
    out_ref[...] = (residual + out).astype(out_ref.dtype)


def _build_static_operands(p):
    """Host-side (one-off) packing of weights + structural constants."""
    # in_proj columns re-laid out onto 128-lane-aligned segments, stored bf16 (MXU operand).
    in_w = p["in_w"]                                            # [H, 164] natural HF layout
    in_w_pad = jnp.zeros((HIDDEN, PROJ_PAD), jnp.float32)
    in_w_pad = in_w_pad.at[:, GATE_OFF:GATE_OFF + INTERMEDIATE].set(in_w[:, :INTERMEDIATE])
    in_w_pad = in_w_pad.at[:, DT_OFF:DT_OFF + NUM_HEADS].set(in_w[:, INTERMEDIATE + CONV_DIM:])
    in_w_pad = in_w_pad.at[:, HBC_OFF:HBC_OFF + CONV_DIM].set(
        in_w[:, INTERMEDIATE:INTERMEDIATE + CONV_DIM])
    in_w_pad = in_w_pad.astype(jnp.bfloat16)

    # structural constants (compile-time-constant masks / selectors / shift matrices)
    pos = np.arange(BL)
    seq = pos // SEQ
    trilf = ((pos[:, None] >= pos[None, :]) &
             (seq[:, None] == seq[None, :])).astype(np.float32)            # [32, 32]
    maskf   = np.tile(trilf, (1, NUM_HEADS))                               # [32, 128]
    colmask = np.tile(trilf.T, (1, NUM_HEADS))                             # [32, 128]
    headcol = np.kron(np.eye(NUM_HEADS, dtype=np.float32),
                      np.ones((1, BL), np.float32))                        # [4, 128]
    headexp = np.kron(np.eye(NUM_HEADS, dtype=np.float32),
                      np.ones((1, HEAD_DIM), np.float32))                  # [4, 64]
    xbdsel  = np.kron(np.eye(NUM_HEADS, dtype=np.float32),
                      np.ones((BL, HEAD_DIM), np.float32))                 # [128, 64]
    shifts = np.zeros(((CONV_K - 1) * BL, BL), np.float32)                 # [96, 32]
    for s in range(1, CONV_K):
        for t in range(BL):
            tp = t - s
            if tp >= 0 and seq[t] == seq[tp]:
                shifts[(s - 1) * BL + t, tp] = 1.0

    neg_a = -jnp.exp(p["A_log"])                                 # [1, nh]   A = -exp(A_log)
    d_exp = jnp.repeat(p["D"], HEAD_DIM, axis=1)                 # [1, I]

    slab = jnp.zeros((CONST_ROWS, 128), jnp.float32)
    slab = slab.at[R_VEC + 0, :HIDDEN].set(p["norm_w"][0])
    slab = slab.at[R_VEC + 1, :CONV_DIM].set(p["conv_b"][0])
    slab = slab.at[R_VEC + 2, :NUM_HEADS].set(p["dt_bias"][0])
    slab = slab.at[R_VEC + 3, :NUM_HEADS].set(neg_a[0])
    slab = slab.at[R_VEC + 4, :INTERMEDIATE].set(d_exp[0])
    slab = slab.at[R_VEC + 5, :INTERMEDIATE].set(p["gated_w"][0])
    slab = slab.at[R_CONVW:R_CONVW + CONV_K, :CONV_DIM].set(p["conv_w"])
    slab = slab.at[R_HEADCOLS:R_HEADCOLS + NUM_HEADS, :].set(headcol)
    slab = slab.at[R_HEADEXP:R_HEADEXP + NUM_HEADS, :INTERMEDIATE].set(headexp)
    slab = slab.at[R_TRILF:R_TRILF + BL, :BL].set(trilf)
    slab = slab.at[R_MASKF:R_MASKF + BL, :].set(maskf)
    slab = slab.at[R_COLMASK:R_COLMASK + BL, :].set(colmask)
    slab = slab.at[R_SHIFTS:R_SHIFTS + (CONV_K - 1) * BL, :BL].set(shifts)
    slab = slab.at[R_XBDSEL:R_XBDSEL + NUM_HEADS * BL, :INTERMEDIATE].set(xbdsel)
    slab = slab.at[R_OUTW:R_OUTW + INTERMEDIATE, :HIDDEN].set(p["out_w"])
    return in_w_pad, slab


def mamba2_block(hs, p):
    B, L, H = hs.shape
    assert (B, L, H) == (BATCH, SEQ, HIDDEN)

    in_w_pad, slab = _build_static_operands(p)

    # TODO(synk): on v7x (2 TCs/chip) split the batch across cores with grid=(BATCH,) and
    # dimension_semantics=("parallel",); on v5e/v6e the merged single-step slab is optimal.
    out = pl.pallas_call(
        mamba2_block_kernel,
        out_shape=jax.ShapeDtypeStruct((BL, H), jnp.float32),
        grid_spec=pltpu.PrefetchScalarGridSpec(
            num_scalar_prefetch=0,
            grid=(1,),                                           # whole batch in one step
            in_specs=[pl.BlockSpec((BL, H), lambda i: (0, 0)),
                      pl.BlockSpec((HIDDEN, PROJ_PAD), lambda i: (0, 0)),
                      pl.BlockSpec((CONST_ROWS, 128), lambda i: (0, 0))],
            out_specs=pl.BlockSpec((BL, H), lambda i: (0, 0)),
        ),
        compiler_params=pltpu.CompilerParams(dimension_semantics=("arbitrary",)),
    )(hs.reshape(BL, H).astype(jnp.float32), in_w_pad, slab)
    return out.reshape(B, L, H)


# ----------------------- pure-JAX reference (sequential SSM recurrence) --------
def mamba2_block_ref(hs, p):
    x = hs.astype(jnp.float32)
    residual = x
    var = jnp.mean(x * x, -1, keepdims=True)
    xn = p["norm_w"][0] * (x * lax.rsqrt(var + RMS_EPS))
    proj = xn @ p["in_w"]
    gate = proj[..., :INTERMEDIATE]
    hbc = proj[..., INTERMEDIATE:INTERMEDIATE + CONV_DIM]
    dt_raw = proj[..., INTERMEDIATE + CONV_DIM:]
    L = hs.shape[1]
    acc = jnp.zeros_like(hbc)
    for k in range(CONV_K):
        s = CONV_K - 1 - k
        shifted = jnp.pad(hbc, ((0, 0), (s, 0), (0, 0)))[:, :L]
        acc = acc + shifted * p["conv_w"][k]
    acc = acc + p["conv_b"][0]
    hbc_act = acc * jax.nn.sigmoid(acc)
    hid = hbc_act[..., :INTERMEDIATE]
    b_all = hbc_act[..., INTERMEDIATE:INTERMEDIATE + N_GROUPS * SSM_STATE]
    c_all = hbc_act[..., INTERMEDIATE + N_GROUPS * SSM_STATE:]
    dt = jax.nn.softplus(dt_raw + p["dt_bias"][0])
    A = -jnp.exp(p["A_log"][0])
    Bsz = hs.shape[0]
    xh = hid.reshape(Bsz, L, NUM_HEADS, HEAD_DIM)
    Bh = jnp.tile(b_all.reshape(Bsz, L, N_GROUPS, SSM_STATE), (1, 1, NUM_HEADS // N_GROUPS, 1))
    Ch = jnp.tile(c_all.reshape(Bsz, L, N_GROUPS, SSM_STATE), (1, 1, NUM_HEADS // N_GROUPS, 1))

    def scan_fn(state, inp):
        x_t, b_t, c_t, dt_t = inp
        dA = jnp.exp(A * dt_t)
        state = dA[..., None, None] * state + (dt_t[..., None, None] * x_t[..., :, None]) * b_t[..., None, :]
        y_t = jnp.sum(state * c_t[..., None, :], -1)
        return state, y_t

    state0 = jnp.zeros((Bsz, NUM_HEADS, HEAD_DIM, SSM_STATE), jnp.float32)
    xs = (jnp.moveaxis(xh, 1, 0), jnp.moveaxis(Bh, 1, 0),
          jnp.moveaxis(Ch, 1, 0), jnp.moveaxis(dt, 1, 0))
    _, ys = lax.scan(scan_fn, state0, xs)
    y = jnp.moveaxis(ys, 0, 1) + p["D"][0][None, None, :, None] * xh
    y = y.reshape(Bsz, L, INTERMEDIATE)
    yg = y * (gate * jax.nn.sigmoid(gate))
    var2 = jnp.mean(yg * yg, -1, keepdims=True)
    yn = p["gated_w"][0] * (yg * lax.rsqrt(var2 + RMS_EPS))
    return residual + yn @ p["out_w"]


if __name__ == "__main__":
    key = jax.random.PRNGKey(0)
    ks = jax.random.split(key, 6)
    params = {
        # Mamba2RMSNorm weight (hidden_size,) -> stored (1, H)
        "norm_w":  jnp.ones((1, HIDDEN), jnp.float32),
        # in_proj: torch Linear(H, PROJ) weight [PROJ, H] -> stored transposed [H, PROJ]
        "in_w":    0.02 * jax.random.normal(ks[0], (HIDDEN, PROJ), jnp.float32),
        # depthwise conv1d weight [conv_dim, 1, K] -> stored [K, conv_dim]
        "conv_w":  0.2 * jax.random.normal(ks[1], (CONV_K, CONV_DIM), jnp.float32),
        "conv_b":  0.05 * jax.random.normal(ks[2], (1, CONV_DIM), jnp.float32),
        "dt_bias": 0.1 * jax.random.normal(ks[3], (1, NUM_HEADS), jnp.float32),
        "A_log":   jnp.log(jnp.arange(1, NUM_HEADS + 1, dtype=jnp.float32)).reshape(1, NUM_HEADS),
        "D":       jnp.ones((1, NUM_HEADS), jnp.float32),
        # MambaRMSNormGated weight (intermediate,)
        "gated_w": jnp.ones((1, INTERMEDIATE), jnp.float32),
        # out_proj: torch Linear(I, H) weight [H, I] -> stored transposed [I, H]
        "out_w":   0.02 * jax.random.normal(ks[4], (INTERMEDIATE, HIDDEN), jnp.float32),
    }

    hidden_states = jax.random.normal(ks[5], (BATCH, SEQ, HIDDEN), jnp.float32)

    out = mamba2_block(hidden_states, params)
    out = jax.block_until_ready(out)

    ref = jax.block_until_ready(mamba2_block_ref(hidden_states, params))
    assert out.shape == (BATCH, SEQ, HIDDEN)
    if not bool(jnp.allclose(out, ref, atol=1e-2, rtol=1e-2)):
        raise AssertionError("Pallas kernel output does not match reference")

    print("KERNEL_OK")
</pallas_src>

<mosaic_0001>
module attributes {stable_mosaic.version = 11 : i64} {
  func.func @mamba2_block_kernel(%arg0: i32, %arg1: memref<32x32xf32, #tpu.memory_space<vmem>>, %arg2: memref<32x256xbf16, #tpu.memory_space<vmem>>, %arg3: memref<416x128xf32, #tpu.memory_space<vmem>>, %arg4: memref<32x32xf32, #tpu.memory_space<vmem>>) attributes {dimension_semantics = [#tpu.dimension_semantics<arbitrary>], iteration_bounds = array<i64: 1>, scalar_prefetch = 0 : i64, scratch_operands = 0 : i64, tpu.core_type = #tpu.core_type<tc>, window_params = [{pipeline_mode = #tpu.pipeline_mode<synchronous>, transform_indices = @transform_0, window_bounds = array<i64: 32, 32>}, {pipeline_mode = #tpu.pipeline_mode<synchronous>, transform_indices = @transform_1, window_bounds = array<i64: 32, 256>}, {pipeline_mode = #tpu.pipeline_mode<synchronous>, transform_indices = @transform_2, window_bounds = array<i64: 416, 128>}, {pipeline_mode = #tpu.pipeline_mode<synchronous>, transform_indices = @transform_3, window_bounds = array<i64: 32, 32>}]} {
    %c0 = arith.constant 0 : index
    %c0_0 = arith.constant 0 : index
    %0 = vector.load %arg1[%c0, %c0_0] : memref<32x32xf32, #tpu.memory_space<vmem>>, vector<32x32xf32>
    %c0_1 = arith.constant 0 : index
    %c0_2 = arith.constant 0 : index
    %1 = vector.load %arg3[%c0_1, %c0_2] : memref<416x128xf32, #tpu.memory_space<vmem>>, vector<1x32xf32>
    %c1 = arith.constant 1 : index
    %c0_3 = arith.constant 0 : index
    %2 = vector.load %arg3[%c1, %c0_3] : memref<416x128xf32, #tpu.memory_space<vmem>>, vector<1x96xf32>
    %c2 = arith.constant 2 : index
    %c0_4 = arith.constant 0 : index
    %3 = vector.load %arg3[%c2, %c0_4] : memref<416x128xf32, #tpu.memory_space<vmem>>, vector<1x4xf32>
    %c3 = arith.constant 3 : index
    %c0_5 = arith.constant 0 : index
    %4 = vector.load %arg3[%c3, %c0_5] : memref<416x128xf32, #tpu.memory_space<vmem>>, vector<1x4xf32>
    %c4 = arith.constant 4 : index
    %c0_6 = arith.constant 0 : index
    %5 = vector.load %arg3[%c4, %c0_6] : memref<416x128xf32, #tpu.memory_space<vmem>>, vector<1x64xf32>
    %c5 = arith.constant 5 : index
    %c0_7 = arith.constant 0 : index
    %6 = vector.load %arg3[%c5, %c0_7] : memref<416x128xf32, #tpu.memory_space<vmem>>, vector<1x64xf32>
    %c8 = arith.constant 8 : index
    %c0_8 = arith.constant 0 : index
    %7 = vector.load %arg3[%c8, %c0_8] : memref<416x128xf32, #tpu.memory_space<vmem>>, vector<4x96xf32>
    %c16 = arith.constant 16 : index
    %c0_9 = arith.constant 0 : index
    %8 = vector.load %arg3[%c16, %c0_9] : memref<416x128xf32, #tpu.memory_space<vmem>>, vector<4x128xf32>
    %c24 = arith.constant 24 : index
    %c0_10 = arith.constant 0 : index
    %9 = vector.load %arg3[%c24, %c0_10] : memref<416x128xf32, #tpu.memory_space<vmem>>, vector<4x64xf32>
    %c32 = arith.constant 32 : index
    %c0_11 = arith.constant 0 : index
    %10 = vector.load %arg3[%c32, %c0_11] : memref<416x128xf32, #tpu.memory_space<vmem>>, vector<32x32xf32>
    %c64 = arith.constant 64 : index
    %c0_12 = arith.constant 0 : index
    %11 = vector.load %arg3[%c64, %c0_12] : memref<416x128xf32, #tpu.memory_space<vmem>>, vector<32x128xf32>
    %c96 = arith.constant 96 : index
    %c0_13 = arith.constant 0 : index
    %12 = vector.load %arg3[%c96, %c0_13] : memref<416x128xf32, #tpu.memory_space<vmem>>, vector<32x128xf32>
    %c128 = arith.constant 128 : index
    %c0_14 = arith.constant 0 : index
    %13 = vector.load %arg3[%c128, %c0_14] : memref<416x128xf32, #tpu.memory_space<vmem>>, vector<96x32xf32>
    %c224 = arith.constant 224 : index
    %c0_15 = arith.constant 0 : index
    %14 = vector.load %arg3[%c224, %c0_15] : memref<416x128xf32, #tpu.memory_space<vmem>>, vector<128x64xf32>
    %c352 = arith.constant 352 : index
    %c0_16 = arith.constant 0 : index
    %15 = vector.load %arg3[%c352, %c0_16] : memref<416x128xf32, #tpu.memory_space<vmem>>, vector<64x32xf32>
    %16 = arith.mulf %0, %0 : vector<32x32xf32>
    %cst = arith.constant dense<0.000000e+00> : vector<32xf32>
    %17 = vector.multi_reduction <add>, %16, %cst [1] : vector<32x32xf32> to vector<32xf32>
    %18 = vector.shape_cast %17 : vector<32xf32> to vector<32x1xf32>
    %cst_17 = arith.constant 3.200000e+01 : f32
    %19 = vector.broadcast %cst_17 : f32 to vector<32x1xf32>
    %20 = arith.divf %18, %19 : vector<32x1xf32>
    %cst_18 = arith.constant 9.99999974E-6 : f32
    %21 = vector.broadcast %cst_18 : f32 to vector<32x1xf32>
    %22 = arith.addf %20, %21 : vector<32x1xf32>
    %23 = math.rsqrt %22 : vector<32x1xf32>
    %24 = vector.broadcast %23 : vector<32x1xf32> to vector<32x32xf32>
    %25 = arith.mulf %0, %24 : vector<32x32xf32>
    %26 = vector.broadcast %1 : vector<1x32xf32> to vector<32x32xf32>
    %27 = arith.mulf %26, %25 : vector<32x32xf32>
    %28 = arith.truncf %27 : vector<32x32xf32> to vector<32x32xbf16>
    %c0_19 = arith.constant 0 : index
    %c0_20 = arith.constant 0 : index
    %29 = vector.load %arg2[%c0_19, %c0_20] : memref<32x256xbf16, #tpu.memory_space<vmem>>, vector<32x256xbf16>
    %cst_21 = arith.constant dense<0.000000e+00> : vector<32x256xf32>
    %30 = tpu.matmul %28, %29, %cst_21 {dimension_numbers = #tpu.dot_dimension_numbers<[1], [0], [0], [1], [0, 0, 1, 1], [], []>} : vector<32x32xbf16>, vector<32x256xbf16>, vector<32x256xf32> -> vector<32x256xf32>
    %31 = vector.extract_strided_slice %30 {offsets = [0, 0], sizes = [32, 64], strides = [1, 1]} : vector<32x256xf32> to vector<32x64xf32>
    %32 = vector.extract_strided_slice %30 {offsets = [0, 64], sizes = [32, 4], strides = [1, 1]} : vector<32x256xf32> to vector<32x4xf32>
    %33 = vector.extract_strided_slice %30 {offsets = [0, 128], sizes = [32, 96], strides = [1, 1]} : vector<32x256xf32> to vector<32x96xf32>
    %cst_22 = arith.constant dense<0.000000e+00> : vector<96x96xf32>
    %34 = tpu.matmul %13, %33, %cst_22 {dimension_numbers = #tpu.dot_dimension_numbers<[1], [0], [0], [1], [0, 0, 1, 1], [], []>} : vector<96x32xf32>, vector<32x96xf32>, vector<96x96xf32> -> vector<96x96xf32>
    %35 = vector.extract_strided_slice %7 {offsets = [3, 0], sizes = [1, 96], strides = [1, 1]} : vector<4x96xf32> to vector<1x96xf32>
    %36 = vector.broadcast %35 : vector<1x96xf32> to vector<32x96xf32>
    %37 = arith.mulf %33, %36 : vector<32x96xf32>
    %38 = vector.extract_strided_slice %34 {offsets = [0, 0], sizes = [32, 96], strides = [1, 1]} : vector<96x96xf32> to vector<32x96xf32>
    %39 = vector.extract_strided_slice %7 {offsets = [2, 0], sizes = [1, 96], strides = [1, 1]} : vector<4x96xf32> to vector<1x96xf32>
    %40 = vector.broadcast %39 : vector<1x96xf32> to vector<32x96xf32>
    %41 = arith.mulf %38, %40 : vector<32x96xf32>
    %42 = arith.addf %37, %41 : vector<32x96xf32>
    %43 = vector.extract_strided_slice %34 {offsets = [32, 0], sizes = [32, 96], strides = [1, 1]} : vector<96x96xf32> to vector<32x96xf32>
    %44 = vector.extract_strided_slice %7 {offsets = [1, 0], sizes = [1, 96], strides = [1, 1]} : vector<4x96xf32> to vector<1x96xf32>
    %45 = vector.broadcast %44 : vector<1x96xf32> to vector<32x96xf32>
    %46 = arith.mulf %43, %45 : vector<32x96xf32>
    %47 = arith.addf %42, %46 : vector<32x96xf32>
    %48 = vector.extract_strided_slice %34 {offsets = [64, 0], sizes = [32, 96], strides = [1, 1]} : vector<96x96xf32> to vector<32x96xf32>
    %49 = vector.extract_strided_slice %7 {offsets = [0, 0], sizes = [1, 96], strides = [1, 1]} : vector<4x96xf32> to vector<1x96xf32>
    %50 = vector.broadcast %49 : vector<1x96xf32> to vector<32x96xf32>
    %51 = arith.mulf %48, %50 : vector<32x96xf32>
    %52 = arith.addf %47, %51 : vector<32x96xf32>
    %53 = vector.broadcast %2 : vector<1x96xf32> to vector<32x96xf32>
    %54 = arith.addf %52, %53 : vector<32x96xf32>
    %55 = arith.negf %54 : vector<32x96xf32>
    %56 = math.exp %55 : vector<32x96xf32>
    %cst_23 = arith.constant 1.000000e+00 : f32
    %57 = vector.broadcast %cst_23 : f32 to vector<32x96xf32>
    %58 = arith.addf %57, %56 : vector<32x96xf32>
    %59 = arith.divf %57, %58 : vector<32x96xf32>
    %60 = arith.mulf %54, %59 : vector<32x96xf32>
    %61 = vector.extract_strided_slice %60 {offsets = [0, 0], sizes = [32, 64], strides = [1, 1]} : vector<32x96xf32> to vector<32x64xf32>
    %62 = vector.extract_strided_slice %60 {offsets = [0, 64], sizes = [32, 16], strides = [1, 1]} : vector<32x96xf32> to vector<32x16xf32>
    %63 = vector.extract_strided_slice %60 {offsets = [0, 80], sizes = [32, 16], strides = [1, 1]} : vector<32x96xf32> to vector<32x16xf32>
    %64 = vector.broadcast %3 : vector<1x4xf32> to vector<32x4xf32>
    %65 = arith.addf %32, %64 : vector<32x4xf32>
    %cst_24 = arith.constant 0.000000e+00 : f32
    %66 = vector.broadcast %cst_24 : f32 to vector<32x4xf32>
    %67 = arith.maximumf %65, %66 : vector<32x4xf32>
    %68 = vector.broadcast %cst_24 : f32 to vector<32x4xf32>
    %69 = arith.subf %65, %68 : vector<32x4xf32>
    %70 = arith.cmpf one, %69, %69 : vector<32x4xf32>
    %71 = vector.broadcast %cst_24 : f32 to vector<32x4xf32>
    %72 = arith.addf %65, %71 : vector<32x4xf32>
    %73 = math.absf %69 : vector<32x4xf32>
    %cst_25 = arith.constant 0.000000e+00 : f32
    %74 = vector.broadcast %cst_25 : f32 to vector<32x4xf32>
    %75 = arith.subf %74, %73 : vector<32x4xf32>
    %76 = math.exp %75 : vector<32x4xf32>
    %77 = math.log1p %76 : vector<32x4xf32>
    %78 = arith.addf %67, %77 : vector<32x4xf32>
    %79 = arith.select %70, %72, %78 : vector<32x4xi1>, vector<32x4xf32>
    %80 = vector.broadcast %4 : vector<1x4xf32> to vector<32x4xf32>
    %81 = arith.mulf %79, %80 : vector<32x4xf32>
    %cst_26 = arith.constant dense<0.000000e+00> : vector<32x128xf32>
    %82 = tpu.matmul %81, %8, %cst_26 {dimension_numbers = #tpu.dot_dimension_numbers<[1], [0], [0], [1], [0, 0, 1, 1], [], []>} : vector<32x4xf32>, vector<4x128xf32>, vector<32x128xf32> -> vector<32x128xf32>
    %cst_27 = arith.constant dense<0.000000e+00> : vector<32x128xf32>
    %83 = tpu.matmul %10, %82, %cst_27 {dimension_numbers = #tpu.dot_dimension_numbers<[1], [0], [0], [1], [0, 0, 1, 1], [], []>} : vector<32x32xf32>, vector<32x128xf32>, vector<32x128xf32> -> vector<32x128xf32>
    %84 = arith.mulf %12, %82 : vector<32x128xf32>
    %cst_28 = arith.constant dense<0.000000e+00> : vector<128xf32>
    %85 = vector.multi_reduction <add>, %84, %cst_28 [0] : vector<32x128xf32> to vector<128xf32>
    %86 = vector.shape_cast %85 : vector<128xf32> to vector<1x128xf32>
    %cst_29 = arith.constant 5.000000e-01 : f32
    %87 = vector.broadcast %cst_29 : f32 to vector<32x128xf32>
    %88 = arith.cmpf ogt, %11, %87 : vector<32x128xf32>
    %89 = vector.broadcast %86 : vector<1x128xf32> to vector<32x128xf32>
    %90 = arith.subf %83, %89 : vector<32x128xf32>
    %cst_30 = arith.constant 0.000000e+00 : f32
    %91 = vector.broadcast %cst_30 : f32 to vector<32x128xf32>
    %92 = arith.select %88, %90, %91 : vector<32x128xi1>, vector<32x128xf32>
    %93 = math.exp %92 : vector<32x128xf32>
    %94 = arith.truncf %63 : vector<32x16xf32> to vector<32x16xbf16>
    %95 = arith.truncf %62 : vector<32x16xf32> to vector<32x16xbf16>
    %cst_31 = arith.constant dense<0.000000e+00> : vector<32x32xf32>
    %96 = tpu.matmul %94, %95, %cst_31 {dimension_numbers = #tpu.dot_dimension_numbers<[1], [1], [0], [0], [0, 0, 1, 0], [], []>} : vector<32x16xbf16>, vector<32x16xbf16>, vector<32x32xf32> -> vector<32x32xf32>
    %97 = tpu.concatenate %96, %96, %96, %96 in 1 : vector<32x32xf32>, vector<32x32xf32>, vector<32x32xf32>, vector<32x32xf32> -> vector<32x128xf32>
    %98 = arith.mulf %97, %93 : vector<32x128xf32>
    %cst_32 = arith.constant 0.000000e+00 : f32
    %99 = vector.broadcast %cst_32 : f32 to vector<32x128xf32>
    %100 = arith.select %88, %98, %99 : vector<32x128xi1>, vector<32x128xf32>
    %cst_33 = arith.constant dense<0.000000e+00> : vector<32x64xf32>
    %101 = tpu.matmul %79, %9, %cst_33 {dimension_numbers = #tpu.dot_dimension_numbers<[1], [0], [0], [1], [0, 0, 1, 1], [], []>} : vector<32x4xf32>, vector<4x64xf32>, vector<32x64xf32> -> vector<32x64xf32>
    %102 = arith.mulf %61, %101 : vector<32x64xf32>
    %103 = tpu.concatenate %102, %102, %102, %102 in 0 : vector<32x64xf32>, vector<32x64xf32>, vector<32x64xf32>, vector<32x64xf32> -> vector<128x64xf32>
    %104 = arith.mulf %14, %103 : vector<128x64xf32>
    %105 = arith.truncf %100 : vector<32x128xf32> to vector<32x128xbf16>
    %106 = arith.truncf %104 : vector<128x64xf32> to vector<128x64xbf16>
    %cst_34 = arith.constant dense<0.000000e+00> : vector<32x64xf32>
    %107 = tpu.matmul %105, %106, %cst_34 {dimension_numbers = #tpu.dot_dimension_numbers<[1], [0], [0], [1], [0, 0, 1, 1], [], []>} : vector<32x128xbf16>, vector<128x64xbf16>, vector<32x64xf32> -> vector<32x64xf32>
    %108 = vector.broadcast %5 : vector<1x64xf32> to vector<32x64xf32>
    %109 = arith.mulf %108, %61 : vector<32x64xf32>
    %110 = arith.addf %107, %109 : vector<32x64xf32>
    %111 = arith.negf %31 : vector<32x64xf32>
    %112 = math.exp %111 : vector<32x64xf32>
    %cst_35 = arith.constant 1.000000e+00 : f32
    %113 = vector.broadcast %cst_35 : f32 to vector<32x64xf32>
    %114 = arith.addf %113, %112 : vector<32x64xf32>
    %115 = arith.divf %113, %114 : vector<32x64xf32>
    %116 = arith.mulf %31, %115 : vector<32x64xf32>
    %117 = arith.mulf %110, %116 : vector<32x64xf32>
    %118 = arith.mulf %117, %117 : vector<32x64xf32>
    %cst_36 = arith.constant dense<0.000000e+00> : vector<32xf32>
    %119 = vector.multi_reduction <add>, %118, %cst_36 [1] : vector<32x64xf32> to vector<32xf32>
    %120 = vector.shape_cast %119 : vector<32xf32> to vector<32x1xf32>
    %cst_37 = arith.constant 6.400000e+01 : f32
    %121 = vector.broadcast %cst_37 : f32 to vector<32x1xf32>
    %122 = arith.divf %120, %121 : vector<32x1xf32>
    %cst_38 = arith.constant 9.99999974E-6 : f32
    %123 = vector.broadcast %cst_38 : f32 to vector<32x1xf32>
    %124 = arith.addf %122, %123 : vector<32x1xf32>
    %125 = math.rsqrt %124 : vector<32x1xf32>
    %126 = vector.broadcast %125 : vector<32x1xf32> to vector<32x64xf32>
    %127 = arith.mulf %117, %126 : vector<32x64xf32>
    %128 = vector.broadcast %6 : vector<1x64xf32> to vector<32x64xf32>
    %129 = arith.mulf %128, %127 : vector<32x64xf32>
    %130 = arith.truncf %129 : vector<32x64xf32> to vector<32x64xbf16>
    %131 = arith.truncf %15 : vector<64x32xf32> to vector<64x32xbf16>
    %cst_39 = arith.constant dense<0.000000e+00> : vector<32x32xf32>
    %132 = tpu.matmul %130, %131, %cst_39 {dimension_numbers = #tpu.dot_dimension_numbers<[1], [0], [0], [1], [0, 0, 1, 1], [], []>} : vector<32x64xbf16>, vector<64x32xbf16>, vector<32x32xf32> -> vector<32x32xf32>
    %133 = arith.addf %0, %132 : vector<32x32xf32>
    %c0_40 = arith.constant 0 : index
    %c0_41 = arith.constant 0 : index
    %134 = vector.load %arg4[%c0_40, %c0_41] : memref<32x32xf32, #tpu.memory_space<vmem>>, vector<32x32xf32>
    tpu.vector_store %arg4[%c0_40, %c0_41], %133 {strides = array<i32>} : memref<32x32xf32, #tpu.memory_space<vmem>>, vector<32x32xf32>,
    return
  }
  func.func @transform_0(%arg0: i32) -> (i32, i32) {
    %c0_i32 = arith.constant 0 : i32
    %c0_i32_0 = arith.constant 0 : i32
    %c0_i32_1 = arith.constant 0 : i32
    return %c0_i32, %c0_i32_0 : i32, i32
  }
  func.func @transform_1(%arg0: i32) -> (i32, i32) {
    %c0_i32 = arith.constant 0 : i32
    %c0_i32_0 = arith.constant 0 : i32
    %c0_i32_1 = arith.constant 0 : i32
    return %c0_i32, %c0_i32_0 : i32, i32
  }
  func.func @transform_2(%arg0: i32) -> (i32, i32) {
    %c0_i32 = arith.constant 0 : i32
    %c0_i32_0 = arith.constant 0 : i32
    %c0_i32_1 = arith.constant 0 : i32
    return %c0_i32, %c0_i32_0 : i32, i32
  }
  func.func @transform_3(%arg0: i32) -> (i32, i32) {
    %c0_i32 = arith.constant 0 : i32
    %c0_i32_0 = arith.constant 0 : i32
    %c0_i32_1 = arith.constant 0 : i32
    return %c0_i32, %c0_i32_0 : i32, i32
  }
}

</mosaic_0001>

<llo_original>
// kernel: tpu_custom_call.1
$region0: #{tpu_custom_call.1}
  #allocation0 [shape = 'u32[]', space=smem, size = 0x4, offset = 0x4, fixed_abs, tag = 'smem constant byte address 0x4 - core index']
  #allocation1 [shape = 'u32[144,128]{1,0:T(1,128)}', space=vmem, size = 0x12000, scoped, tag = 'internal scratch']
  %s0 = inlined_call_operand.hbm [shape: f32[32,32], index: 0, kind: input, shape index: {}]
  %s1 = inlined_call_operand.hbm [shape: bf16[32,256], index: 1, kind: input, shape index: {}]
  %s2 = inlined_call_operand.hbm [shape: f32[416,128], index: 2, kind: input, shape index: {}]
  %s3 = inlined_call_operand.hbm [shape: f32[32,32], index: 3, kind: output, shape index: {}]
  %s4 = sld [smem:[#allocation0]]
  $region34: #{tpu_custom_call.1} parent=0
    _
  %s6 = ssub.s32 1, %s4
  %s7 = scalar_select 0, %s6, %s4
  $region1: #{tpu_custom_call.1} parent=0
    #allocation2 [shape = 'u8[16384]{0}', space=vmem, size = 0x4000, scoped, tag = 'input window, operand 0, single buffered']
    #allocation3 [shape = 's32[1]{0}', space=sflag, size = 0x4, scoped, tag = 'scoped memory for tpu_custom_call.1']
    #allocation4 [shape = 's32[1]{0}', space=sflag, size = 0x4, scoped, tag = 'scoped memory for tpu_custom_call.1']
    #allocation5 [shape = 'u8[16384]{0}', space=vmem, size = 0x4000, scoped, tag = 'input window, operand 1, single buffered']
    #allocation6 [shape = 's32[1]{0}', space=sflag, size = 0x4, scoped, tag = 'scoped memory for tpu_custom_call.1']
    #allocation7 [shape = 'u8[212992]{0}', space=vmem, size = 0x34000, scoped, tag = 'input window, operand 2, single buffered']
    #allocation8 [shape = 'u8[16384]{0}', space=vmem, size = 0x4000, scoped, tag = 'output window, operand 0, single buffered']
    %8 = vsyncpa [#allocation3], 0
    %9 = vsyncpa [#allocation6], 0
    %10 = vsyncpa [#allocation4], 0
    // Predicated region
    $region2: #{tpu_custom_call.1} parent=1 // pred_check
      _
    $region3: #{tpu_custom_call.1} parent=1 // pred_check_branch
      %12 = sbr.rel (0) target = $region5
    $region4: #{tpu_custom_call.1} parent=1 // pred_region
      %s14 = ssub.s32 512, 512
      %15 = vsyncadd [#allocation3], %s14
      %s16 = sshll.u32 [#allocation2], 4
      %s17 = int_to_ptr.vmem [resolvable:$true] %s16
      %22 = dma.hbm_to_vmem [thread:$0]  %s0, 512, %s17, [#allocation3], 128, 128, 8
    $region5: #{tpu_custom_call.1} parent=1 // pred_fallthru
      _
    // Predicated region
    $region6: #{tpu_custom_call.1} parent=1 // pred_check
      _
    $region7: #{tpu_custom_call.1} parent=1 // pred_check_branch
      %24 = sbr.rel (0) target = $region9
    $region8: #{tpu_custom_call.1} parent=1 // pred_region
      %s26 = ssub.s32 512, 512
      %27 = vsyncadd [#allocation6], %s26
      %s28 = sshll.u32 [#allocation5], 4
      %s29 = int_to_ptr.vmem [resolvable:$true] %s28
      %34 = dma.hbm_to_vmem [thread:$0]  %s1, 512, %s29, [#allocation6], 128, 128, 8
    $region9: #{tpu_custom_call.1} parent=1 // pred_fallthru
      _
    // Predicated region
    $region10: #{tpu_custom_call.1} parent=1 // pred_check
      _
    $region11: #{tpu_custom_call.1} parent=1 // pred_check_branch
      %36 = sbr.rel (0) target = $region13
    $region12: #{tpu_custom_call.1} parent=1 // pred_region
      %s38 = ssub.s32 6656, 6656
      %39 = vsyncadd [#allocation6], %s38
      %s40 = sshll.u32 [#allocation7], 4
      %s41 = int_to_ptr.vmem [resolvable:$true] %s40
      %46 = dma.hbm_to_vmem [thread:$0]  %s2, 6656, %s41, [#allocation6], 128, 128, 8
    $region13: #{tpu_custom_call.1} parent=1 // pred_fallthru
      _
    // Predicated region
    $region14: #{tpu_custom_call.1} parent=1 // pred_check
      _
    $region15: #{tpu_custom_call.1} parent=1 // pred_check_branch
      %48 = sbr.rel (0) target = $region17
    $region16: #{tpu_custom_call.1} parent=1 // pred_region
      %49 = dma.done [#allocation3], 512
    $region17: #{tpu_custom_call.1} parent=1 // pred_fallthru
      _
    // Predicated region
    $region18: #{tpu_custom_call.1} parent=1 // pred_check
      _
    $region19: #{tpu_custom_call.1} parent=1 // pred_check_branch
      %51 = sbr.rel (0) target = $region21
    $region20: #{tpu_custom_call.1} parent=1 // pred_region
      %52 = dma.done [#allocation6], 512
    $region21: #{tpu_custom_call.1} parent=1 // pred_fallthru
      _
    // Predicated region
    $region22: #{tpu_custom_call.1} parent=1 // pred_check
      _
    $region23: #{tpu_custom_call.1} parent=1 // pred_check_branch
      %54 = sbr.rel (0) target = $region25
    $region24: #{tpu_custom_call.1} parent=1 // pred_region
      %55 = dma.done [#allocation6], 6656
    $region25: #{tpu_custom_call.1} parent=1 // pred_fallthru
      _
    %v57 = vld [vmem:[#allocation2] sm:$0xff]
    %v58 = vld [vmem:[#allocation2 + $0x8] sm:$0xff]
    %v59 = vld [vmem:[#allocation2 + $0x10] sm:$0xff]
    %v60 = vld [vmem:[#allocation2 + $0x18] sm:$0xff]
    %v61 = vld [vmem:[#allocation7] sm:$0x1]
    %v62 = vld [vmem:[#allocation7 + $0x1] sm:$0x1]
    %v63 = vld [vmem:[#allocation7 + $0x2] sm:$0x1]
    %v64 = vld [vmem:[#allocation7 + $0x3] sm:$0x1]
    %v65 = vld [vmem:[#allocation7 + $0x4] sm:$0x1]
    %v66 = vld [vmem:[#allocation7 + $0x5] sm:$0x1]
    %v67 = vld [vmem:[#allocation7 + $0x8] sm:$0xf]
    %v68 = vld [vmem:[#allocation7 + $0x10] sm:$0xf]
    %v69 = vld [vmem:[#allocation7 + $0x18] sm:$0xf]
    %v70 = vld [vmem:[#allocation7 + $0x20] sm:$0xff]
    %v71 = vld [vmem:[#allocation7 + $0x28] sm:$0xff]
    %v72 = vld [vmem:[#allocation7 + $0x30] sm:$0xff]
    %v73 = vld [vmem:[#allocation7 + $0x38] sm:$0xff]
    %v74 = vld [vmem:[#allocation7 + $0x40] sm:$0xff]
    %v75 = vld [vmem:[#allocation7 + $0x48] sm:$0xff]
    %v76 = vld [vmem:[#allocation7 + $0x50] sm:$0xff]
    %v77 = vld [vmem:[#allocation7 + $0x58] sm:$0xff]
    %v78 = vld [vmem:[#allocation7 + $0x60] sm:$0xff]
    %v79 = vld [vmem:[#allocation7 + $0x68] sm:$0xff]
    %v80 = vld [vmem:[#allocation7 + $0x70] sm:$0xff]
    %v81 = vld [vmem:[#allocation7 + $0x78] sm:$0xff]
    %v82 = vld [vmem:[#allocation7 + $0x80] sm:$0xff]
    %v83 = vld [vmem:[#allocation7 + $0x88] sm:$0xff]
    %v84 = vld [vmem:[#allocation7 + $0x90] sm:$0xff]
    %v85 = vld [vmem:[#allocation7 + $0x98] sm:$0xff]
    %v86 = vld [vmem:[#allocation7 + $0xa0] sm:$0xff]
    %v87 = vld [vmem:[#allocation7 + $0xa8] sm:$0xff]
    %v88 = vld [vmem:[#allocation7 + $0xb0] sm:$0xff]
    %v89 = vld [vmem:[#allocation7 + $0xb8] sm:$0xff]
    %v90 = vld [vmem:[#allocation7 + $0xc0] sm:$0xff]
    %v91 = vld [vmem:[#allocation7 + $0xc8] sm:$0xff]
    %v92 = vld [vmem:[#allocation7 + $0xd0] sm:$0xff]
    %v93 = vld [vmem:[#allocation7 + $0xd8] sm:$0xff]
    %v94 = vld [vmem:[#allocation7 + $0xe0] sm:$0xff]
    %v95 = vld [vmem:[#allocation7 + $0xe8] sm:$0xff]
    %v96 = vld [vmem:[#allocation7 + $0xf0] sm:$0xff]
    %v97 = vld [vmem:[#allocation7 + $0xf8] sm:$0xff]
    %v98 = vld [vmem:[#allocation7 + $0x100] sm:$0xff]
    %v99 = vld [vmem:[#allocation7 + $0x108] sm:$0xff]
    %v100 = vld [vmem:[#allocation7 + $0x110] sm:$0xff]
    %v101 = vld [vmem:[#allocation7 + $0x118] sm:$0xff]
    %v102 = vld [vmem:[#allocation7 + $0x120] sm:$0xff]
    %v103 = vld [vmem:[#allocation7 + $0x128] sm:$0xff]
    %v104 = vld [vmem:[#allocation7 + $0x130] sm:$0xff]
    %v105 = vld [vmem:[#allocation7 + $0x138] sm:$0xff]
    %v106 = vld [vmem:[#allocation7 + $0x140] sm:$0xff]
    %v107 = vld [vmem:[#allocation7 + $0x148] sm:$0xff]
    %v108 = vld [vmem:[#allocation7 + $0x150] sm:$0xff]
    %v109 = vld [vmem:[#allocation7 + $0x158] sm:$0xff]
    %v110 = vld [vmem:[#allocation7 + $0x160] sm:$0xff]
    %v111 = vld [vmem:[#allocation7 + $0x168] sm:$0xff]
    %v112 = vld [vmem:[#allocation7 + $0x170] sm:$0xff]
    %v113 = vld [vmem:[#allocation7 + $0x178] sm:$0xff]
    %v114 = vld [vmem:[#allocation7 + $0x180] sm:$0xff]
    %v115 = vld [vmem:[#allocation7 + $0x188] sm:$0xff]
    %v116 = vld [vmem:[#allocation7 + $0x190] sm:$0xff]
    %v117 = vld [vmem:[#allocation7 + $0x198] sm:$0xff]
    %v118 = vmul.f32 %v57, %v57
    %v119 = vmul.f32 %v58, %v58
    %v120 = vmul.f32 %v59, %v59
    %v121 = vmul.f32 %v60, %v60
    %vm122 = vcmask 261120
    %v123 = vsel %vm122, %v118, 0.0
    %124 = vadd.xlane.f32.xlu0 %v123
    %v125 = vpop.xlane.xlu0 %124
    %v126 = vsel %vm122, %v119, 0.0
    %127 = vadd.xlane.f32.xlu0 %v126
    %v128 = vpop.xlane.xlu0 %127
    %v129 = vsel %vm122, %v120, 0.0
    %130 = vadd.xlane.f32.xlu0 %v129
    %v131 = vpop.xlane.xlu0 %130
    %v132 = vsel %vm122, %v121, 0.0
    %133 = vadd.xlane.f32.xlu0 %v132
    %v134 = vpop.xlane.xlu0 %133
    %v135 = vrcp.pop 32.0
    %v136 = vmul.f32 %v125, %v135
    %v137 = vmul.f32 %v128, %v135
    %v138 = vmul.f32 %v131, %v135
    %v139 = vmul.f32 %v134, %v135
    %v140 = vadd.f32 %v136, 1e-05
    %v141 = vadd.f32 %v137, 1e-05
    %v142 = vadd.f32 %v138, 1e-05
    %v143 = vadd.f32 %v139, 1e-05
    %v144 = vrsqrt.pop %v140
    %v145 = vrsqrt.pop %v141
    %v146 = vrsqrt.pop %v142
    %v147 = vrsqrt.pop %v143
    %v148 = vmul.f32 %v57, %v144
    %v149 = vmul.f32 %v58, %v145
    %v150 = vmul.f32 %v59, %v146
    %v151 = vmul.f32 %v60, %v147
    %v152 = vlaneseq
    %v153 = vshrl.u32 %v152, 7
    %v154 = vsub.s32 0, %v153
    %v155 = vrot.slane %v61, %v154
    %v156 = vmul.f32 %v155, %v148
    %v157 = vmul.f32 %v155, %v149
    %v158 = vmul.f32 %v155, %v150
    %v159 = vmul.f32 %v155, %v151
    %v160 = vpack.c.bf16 %v157, %v156
    %v161 = vpack.c.bf16 %v159, %v158
    %v162 = vld [vmem:[#allocation5] sm:$0xff]
    %v163 = vld [vmem:[#allocation5 + $0x8] sm:$0xff]
    %v164 = vld [vmem:[#allocation5 + $0x10] sm:$0xff]
    %v165 = vld [vmem:[#allocation5 + $0x18] sm:$0xff]
    %v170 = vunpack.c.l.b16 %v162
    %v171 = vunpack.c.h.b16 %v162
    %v172 = vunpack.c.l.b16 %v163
    %v173 = vunpack.c.h.b16 %v163
    %v174 = vunpack.c.l.b16 %v164
    %v175 = vunpack.c.h.b16 %v164
    %v176 = vunpack.c.l.b16 %v165
    %v177 = vunpack.c.h.b16 %v165
    %v178 = vpack.c.b16 %v172, %v170
    %v179 = vpack.c.b16 %v173, %v171
    %v180 = vpack.c.b16 %v176, %v174
    %v181 = vpack.c.b16 %v177, %v175
    %v187 = vsel %vm122, %v160, 0
    %v190 = vsel %vm122, %v161, 0
    %192 = vmatprep.subr.bf16.mxu0 0
    %193 = vmatpush1.bf16.msra.mxu0 0
    %194 = vmatprep.subr.bf16.mxu0 0
    %195 = vmatpush1.bf16.msra.mxu0 0
    %196 = vmatprep.subr.bf16.mxu0 0
    %197 = vmatpush1.bf16.msra.mxu0 0
    %198 = vmatprep.subr.bf16.mxu0 0
    %199 = vmatpush1.bf16.msra.mxu0 0
    %200 = vmatprep.subr.bf16.mxu0 0
    %201 = vmatpush1.bf16.msra.mxu0 0
    %202 = vmatprep.subr.bf16.mxu0 0
    %203 = vmatpush1.bf16.msra.mxu0 0
    %204 = vmatprep.subr.bf16.mxu0 %v181
    %205 = vmatpush1.bf16.msra.mxu0 %v180
    %206 = vmatprep.subr.bf16.mxu0 %v179
    %207 = vmatpush1.bf16.msra.mxu0 %v178
    %208 = vmatprep.subr.bf16.mxu0 0
    %209 = vmatpush2.bf16.msra.mxu0 0
    %210 = vmatprep.subr.bf16.mxu0 0
    %211 = vmatpush2.bf16.msra.mxu0 0
    %212 = vmatprep.subr.bf16.mxu0 0
    %213 = vmatpush2.bf16.msra.mxu0 0
    %214 = vmatprep.subr.bf16.mxu0 0
    %215 = vmatpush2.bf16.msra.mxu0 0
    %216 = vmatprep.subr.bf16.mxu0 0
    %217 = vmatpush2.bf16.msra.mxu0 0
    %218 = vmatprep.subr.bf16.mxu0 0
    %219 = vmatpush2.bf16.msra.mxu0 0
    %220 = vmatprep.subr.bf16.mxu0 0
    %221 = vmatpush2.bf16.msra.mxu0 0
    %222 = vmatprep.subr.bf16.mxu0 0
    %223 = vmatpush2.bf16.msra.mxu0 0
    %224 = vmatprep.mubr.bf16.mxu0 0
    %225 = vmatmul.mubr.bf16.gmra.mxu0 %v187
    %v226 = vpop.f32.mrf.mxu0
    %v227 = vadd.f32 0.0, %v226
    %v228 = vpop.f32.mrf.mxu0
    %v229 = vadd.f32 0.0, %v228
    %v230 = vpop.f32.mrf.mxu0
    %v231 = vadd.f32 0.0, %v230
    %v232 = vpop.f32.mrf.mxu0
    %v233 = vadd.f32 0.0, %v232
    %234 = vmatprep.mubr.bf16.mxu0 0
    %235 = vmatmul.mubr.bf16.gmra.mxu0 %v190
    %v236 = vpop.f32.mrf.mxu0
    %v237 = vadd.f32 0.0, %v236
    %v238 = vpop.f32.mrf.mxu0
    %v239 = vadd.f32 0.0, %v238
    %v240 = vpop.f32.mrf.mxu0
    %v241 = vadd.f32 0.0, %v240
    %v242 = vpop.f32.mrf.mxu0
    %v243 = vadd.f32 0.0, %v242
    %244 = vdwg.mxu0
    %v246 = vsel %vm122, %v82, 0
    %v249 = vsel %vm122, %v83, 0
    %v252 = vsel %vm122, %v84, 0
    %v255 = vsel %vm122, %v85, 0
    %v258 = vsel %vm122, %v86, 0
    %v261 = vsel %vm122, %v87, 0
    %v264 = vsel %vm122, %v88, 0
    %v267 = vsel %vm122, %v89, 0
    %v270 = vsel %vm122, %v90, 0
    %v273 = vsel %vm122, %v91, 0
    %v276 = vsel %vm122, %v92, 0
    %v279 = vsel %vm122, %v93, 0
    %281 = vmatprep.subr.mxu0 0.0
    %282 = vmatpush1.msra.mxu0 0.0
    %283 = vmatprep.subr.mxu0 0.0
    %284 = vmatpush1.msra.mxu0 0.0
    %285 = vmatprep.subr.mxu0 0.0
    %286 = vmatpush1.msra.mxu0 0.0
    %287 = vmatprep.subr.mxu0 0.0
    %288 = vmatpush1.msra.mxu0 0.0
    %289 = vmatprep.subr.mxu0 0.0
    %290 = vmatpush1.msra.mxu0 0.0
    %291 = vmatprep.subr.mxu0 0.0
    %292 = vmatpush1.msra.mxu0 0.0
    %293 = vmatprep.subr.mxu0 0.0
    %294 = vmatpush1.msra.mxu0 0.0
    %295 = vmatprep.subr.mxu0 0.0
    %296 = vmatpush1.msra.mxu0 0.0
    %297 = vmatprep.subr.mxu0 0.0
    %298 = vmatpush1.msra.mxu0 0.0
    %299 = vmatprep.subr.mxu0 0.0
    %300 = vmatpush1.msra.mxu0 0.0
    %301 = vmatprep.subr.mxu0 0.0
    %302 = vmatpush1.msra.mxu0 0.0
    %303 = vmatprep.subr.mxu0 0.0
    %304 = vmatpush1.msra.mxu0 0.0
    %305 = vmatprep.subr.mxu0 0.0
    %306 = vmatpush1.msra.mxu0 %v243
    %307 = vmatprep.subr.mxu0 0.0
    %308 = vmatpush1.msra.mxu0 %v239
    %309 = vmatprep.subr.mxu0 0.0
    %310 = vmatpush1.msra.mxu0 %v233
    %311 = vmatprep.subr.mxu0 0.0
    %312 = vmatpush1.msra.mxu0 %v229
    %313 = vmatprep.subr.mxu0 0.0
    %314 = vmatpush2.msra.mxu0 0.0
    %315 = vmatprep.subr.mxu0 0.0
    %316 = vmatpush2.msra.mxu0 0.0
    %317 = vmatprep.subr.mxu0 0.0
    %318 = vmatpush2.msra.mxu0 0.0
    %319 = vmatprep.subr.mxu0 0.0
    %320 = vmatpush2.msra.mxu0 0.0
    %321 = vmatprep.subr.mxu0 0.0
    %322 = vmatpush2.msra.mxu0 0.0
    %323 = vmatprep.subr.mxu0 0.0
    %324 = vmatpush2.msra.mxu0 0.0
    %325 = vmatprep.subr.mxu0 0.0
    %326 = vmatpush2.msra.mxu0 0.0
    %327 = vmatprep.subr.mxu0 0.0
    %328 = vmatpush2.msra.mxu0 0.0
    %329 = vmatprep.subr.mxu0 0.0
    %330 = vmatpush2.msra.mxu0 0.0
    %331 = vmatprep.subr.mxu0 0.0
    %332 = vmatpush2.msra.mxu0 0.0
    %333 = vmatprep.subr.mxu0 0.0
    %334 = vmatpush2.msra.mxu0 0.0
    %335 = vmatprep.subr.mxu0 0.0
    %336 = vmatpush2.msra.mxu0 0.0
    %337 = vmatprep.subr.mxu0 0.0
    %338 = vmatpush2.msra.mxu0 0.0
    %339 = vmatprep.subr.mxu0 0.0
    %340 = vmatpush2.msra.mxu0 0.0
    %341 = vmatprep.subr.mxu0 0.0
    %342 = vmatpush2.msra.mxu0 0.0
    %343 = vmatprep.subr.mxu0 0.0
    %344 = vmatpush2.msra.mxu0 0.0
    %345 = vmatprep.mubr.f32.mxu0 0.0
    %346 = vmatmul.mubr.f32.gmra.mxu0 %v246
    %v347 = vpop.f32.mrf.mxu0
    %v348 = vadd.f32 0.0, %v347
    %v349 = vpop.f32.mrf.mxu0
    %350 = vmatprep.mubr.f32.mxu0 0.0
    %351 = vmatmul.mubr.f32.gmra.mxu0 %v249
    %v352 = vpop.f32.mrf.mxu0
    %v353 = vadd.f32 0.0, %v352
    %v354 = vpop.f32.mrf.mxu0
    %355 = vmatprep.mubr.f32.mxu0 0.0
    %356 = vmatmul.mubr.f32.gmra.mxu0 %v252
    %v357 = vpop.f32.mrf.mxu0
    %v358 = vadd.f32 0.0, %v357
    %v359 = vpop.f32.mrf.mxu0
    %360 = vmatprep.mubr.f32.mxu0 0.0
    %361 = vmatmul.mubr.f32.gmra.mxu0 %v255
    %v362 = vpop.f32.mrf.mxu0
    %v363 = vadd.f32 0.0, %v362
    %v364 = vpop.f32.mrf.mxu0
    %365 = vmatprep.mubr.f32.mxu0 0.0
    %366 = vmatmul.mubr.f32.gmra.mxu0 %v258
    %v367 = vpop.f32.mrf.mxu0
    %v368 = vadd.f32 0.0, %v367
    %v369 = vpop.f32.mrf.mxu0
    %370 = vmatprep.mubr.f32.mxu0 0.0
    %371 = vmatmul.mubr.f32.gmra.mxu0 %v261
    %v372 = vpop.f32.mrf.mxu0
    %v373 = vadd.f32 0.0, %v372
    %v374 = vpop.f32.mrf.mxu0
    %375 = vmatprep.mubr.f32.mxu0 0.0
    %376 = vmatmul.mubr.f32.gmra.mxu0 %v264
    %v377 = vpop.f32.mrf.mxu0
    %v378 = vadd.f32 0.0, %v377
    %v379 = vpop.f32.mrf.mxu0
    %380 = vmatprep.mubr.f32.mxu0 0.0
    %381 = vmatmul.mubr.f32.gmra.mxu0 %v267
    %v382 = vpop.f32.mrf.mxu0
    %v383 = vadd.f32 0.0, %v382
    %v384 = vpop.f32.mrf.mxu0
    %385 = vmatprep.mubr.f32.mxu0 0.0
    %386 = vmatmul.mubr.f32.gmra.mxu0 %v270
    %v387 = vpop.f32.mrf.mxu0
    %v388 = vadd.f32 0.0, %v387
    %v389 = vpop.f32.mrf.mxu0
    %390 = vmatprep.mubr.f32.mxu0 0.0
    %391 = vmatmul.mubr.f32.gmra.mxu0 %v273
    %v392 = vpop.f32.mrf.mxu0
    %v393 = vadd.f32 0.0, %v392
    %v394 = vpop.f32.mrf.mxu0
    %395 = vmatprep.mubr.f32.mxu0 0.0
    %396 = vmatmul.mubr.f32.gmra.mxu0 %v276
    %v397 = vpop.f32.mrf.mxu0
    %v398 = vadd.f32 0.0, %v397
    %v399 = vpop.f32.mrf.mxu0
    %400 = vmatprep.mubr.f32.mxu0 0.0
    %401 = vmatmul.mubr.f32.gmra.mxu0 %v279
    %v402 = vpop.f32.mrf.mxu0
    %v403 = vadd.f32 0.0, %v402
    %v404 = vpop.f32.mrf.mxu0
    %405 = vdwg.mxu0
    %v406 = vlaneseq
    %v407 = vshrl.u32 %v406, 7
    %v408 = vsub.s32 3, %v407
    %v409 = vrot.slane %v67, %v408
    %v410 = vmul.f32 %v229, %v409
    %v411 = vmul.f32 %v233, %v409
    %v412 = vmul.f32 %v239, %v409
    %v413 = vmul.f32 %v243, %v409
    %v414 = vlaneseq
    %v415 = vshrl.u32 %v414, 7
    %v416 = vsub.s32 2, %v415
    %v417 = vrot.slane %v67, %v416
    %v418 = vmul.f32 %v348, %v417
    %v419 = vmul.f32 %v353, %v417
    %v420 = vmul.f32 %v358, %v417
    %v421 = vmul.f32 %v363, %v417
    %v422 = vadd.f32 %v410, %v418
    %v423 = vadd.f32 %v411, %v419
    %v424 = vadd.f32 %v412, %v420
    %v425 = vadd.f32 %v413, %v421
    %v426 = vlaneseq
    %v427 = vshrl.u32 %v426, 7
    %v428 = vsub.s32 1, %v427
    %v429 = vrot.slane %v67, %v428
    %v430 = vmul.f32 %v368, %v429
    %v431 = vmul.f32 %v373, %v429
    %v432 = vmul.f32 %v378, %v429
    %v433 = vmul.f32 %v383, %v429
    %v434 = vadd.f32 %v422, %v430
    %v435 = vadd.f32 %v423, %v431
    %v436 = vadd.f32 %v424, %v432
    %v437 = vadd.f32 %v425, %v433
    %v438 = vlaneseq
    %v439 = vshrl.u32 %v438, 7
    %v440 = vsub.s32 0, %v439
    %v441 = vrot.slane %v67, %v440
    %v442 = vmul.f32 %v388, %v441
    %v443 = vmul.f32 %v393, %v441
    %v444 = vmul.f32 %v398, %v441
    %v445 = vmul.f32 %v403, %v441
    %v446 = vadd.f32 %v434, %v442
    %v447 = vadd.f32 %v435, %v443
    %v448 = vadd.f32 %v436, %v444
    %v449 = vadd.f32 %v437, %v445
    %v450 = vlaneseq
    %v451 = vshrl.u32 %v450, 7
    %v452 = vsub.s32 0, %v451
    %v453 = vrot.slane %v62, %v452
    %v454 = vadd.f32 %v446, %v453
    %v455 = vadd.f32 %v447, %v453
    %v456 = vadd.f32 %v448, %v453
    %v457 = vadd.f32 %v449, %v453
    %v458 = vxor.u32 %v454, 2147483648
    %v459 = vxor.u32 %v455, 2147483648
    %v460 = vxor.u32 %v456, 2147483648
    %v461 = vxor.u32 %v457, 2147483648
    %v462 = vmul.f32 %v458, 1.442695
    %v463 = vpow.pop %v462
    %v464 = vmul.f32 %v459, 1.442695
    %v465 = vpow.pop %v464
    %v466 = vmul.f32 %v460, 1.442695
    %v467 = vpow.pop %v466
    %v468 = vmul.f32 %v461, 1.442695
    %v469 = vpow.pop %v468
    %v470 = vadd.f32 %v463, 1.0
    %v471 = vadd.f32 %v465, 1.0
    %v472 = vadd.f32 %v467, 1.0
    %v473 = vadd.f32 %v469, 1.0
    %v474 = vrcp.pop %v470
    %v475 = vmul.f32 1.0, %v474
    %v476 = vrcp.pop %v471
    %v477 = vmul.f32 1.0, %v476
    %v478 = vrcp.pop %v472
    %v479 = vmul.f32 1.0, %v478
    %v480 = vrcp.pop %v473
    %v481 = vmul.f32 1.0, %v480
    %v482 = vmul.f32 %v454, %v475
    %v483 = vmul.f32 %v455, %v477
    %v484 = vmul.f32 %v456, %v479
    %v485 = vmul.f32 %v457, %v481
    %v486 = vlaneseq
    %v487 = vshrl.u32 %v486, 7
    %v488 = vsub.s32 0, %v487
    %v489 = vrot.slane %v63, %v488
    %491 = vrot.lane.b32.xlu0 %v489, 64
    %v492 = vpop.permute.xlu0 %491
    %v494 = vadd.f32 %v227, %v492
    %v495 = vadd.f32 %v231, %v492
    %v496 = vadd.f32 %v237, %v492
    %v497 = vadd.f32 %v241, %v492
    %v498 = vmax.f32 %v494, 0.0
    %v499 = vmax.f32 %v495, 0.0
    %v500 = vmax.f32 %v496, 0.0
    %v501 = vmax.f32 %v497, 0.0
    %vm502 = vcmp.ne.f32.partialorder %v494, %v494
    %vm503 = vcmp.ne.f32.partialorder %v495, %v495
    %vm504 = vcmp.ne.f32.partialorder %v496, %v496
    %vm505 = vcmp.ne.f32.partialorder %v497, %v497
    %v506 = vadd.f32 %v494, 0.0
    %v507 = vadd.f32 %v495, 0.0
    %v508 = vadd.f32 %v496, 0.0
    %v509 = vadd.f32 %v497, 0.0
    %v510 = vand.u32 2147483647, %v494
    %v511 = vand.u32 2147483647, %v495
    %v512 = vand.u32 2147483647, %v496
    %v513 = vand.u32 2147483647, %v497
    %v514 = vsub.f32 0.0, %v510
    %v515 = vsub.f32 0.0, %v511
    %v516 = vsub.f32 0.0, %v512
    %v517 = vsub.f32 0.0, %v513
    %v518 = vmul.f32 %v514, 1.442695
    %v519 = vpow.pop %v518
    %v520 = vmul.f32 %v515, 1.442695
    %v521 = vpow.pop %v520
    %v522 = vmul.f32 %v516, 1.442695
    %v523 = vpow.pop %v522
    %v524 = vmul.f32 %v517, 1.442695
    %v525 = vpow.pop %v524
    %v526 = vadd.f32 %v519, 1.0
    %v527 = vlog2.pop %v526
    %v528 = vmul.f32 %v527, 0.6931472
    %v529 = vmul.f32 -0.5, %v519
    %v530 = vadd.f32 %v529, 1.0
    %v531 = vmul.f32 %v530, %v519
    %v532 = vand.u32 2147483647, %v519
    %vm533 = vcmp.lt.f32.partialorder %v532, 0.0004427343
    %v534 = vsel %vm533, %v531, %v528
    %v535 = vadd.f32 %v521, 1.0
    %v536 = vlog2.pop %v535
    %v537 = vmul.f32 %v536, 0.6931472
    %v538 = vmul.f32 -0.5, %v521
    %v539 = vadd.f32 %v538, 1.0
    %v540 = vmul.f32 %v539, %v521
    %v541 = vand.u32 2147483647, %v521
    %vm542 = vcmp.lt.f32.partialorder %v541, 0.0004427343
    %v543 = vsel %vm542, %v540, %v537
    %v544 = vadd.f32 %v523, 1.0
    %v545 = vlog2.pop %v544
    %v546 = vmul.f32 %v545, 0.6931472
    %v547 = vmul.f32 -0.5, %v523
    %v548 = vadd.f32 %v547, 1.0
    %v549 = vmul.f32 %v548, %v523
    %v550 = vand.u32 2147483647, %v523
    %vm551 = vcmp.lt.f32.partialorder %v550, 0.0004427343
    %v552 = vsel %vm551, %v549, %v546
    %v553 = vadd.f32 %v525, 1.0
    %v554 = vlog2.pop %v553
    %v555 = vmul.f32 %v554, 0.6931472
    %v556 = vmul.f32 -0.5, %v525
    %v557 = vadd.f32 %v556, 1.0
    %v558 = vmul.f32 %v557, %v525
    %v559 = vand.u32 2147483647, %v525
    %vm560 = vcmp.lt.f32.partialorder %v559, 0.0004427343
    %v561 = vsel %vm560, %v558, %v555
    %v562 = vadd.f32 %v498, %v534
    %v563 = vadd.f32 %v499, %v543
    %v564 = vadd.f32 %v500, %v552
    %v565 = vadd.f32 %v501, %v561
    %v566 = vsel %vm502, %v506, %v562
    %v567 = vsel %vm503, %v507, %v563
    %v568 = vsel %vm504, %v508, %v564
    %v569 = vsel %vm505, %v509, %v565
    %v570 = vlaneseq
    %v571 = vshrl.u32 %v570, 7
    %v572 = vsub.s32 0, %v571
    %v573 = vrot.slane %v64, %v572
    %575 = vrot.lane.b32.xlu0 %v573, 64
    %v576 = vpop.permute.xlu0 %575
    %v578 = vmul.f32 %v566, %v576
    %v579 = vmul.f32 %v567, %v576
    %v580 = vmul.f32 %v568, %v576
    %v581 = vmul.f32 %v569, %v576
    %586 = vrot.lane.b32.xlu0 %v578, 64
    %v587 = vpop.permute.xlu0 %586
    %588 = vrot.lane.b32.xlu0 %v579, 64
    %v589 = vpop.permute.xlu0 %588
    %590 = vrot.lane.b32.xlu0 %v580, 64
    %v591 = vpop.permute.xlu0 %590
    %592 = vrot.lane.b32.xlu0 %v581, 64
    %v593 = vpop.permute.xlu0 %592
    %vm594 = vcmask 31744
    %v595 = vsel %vm594, %v587, 0
    %v597 = vsel %vm594, %v589, 0
    %v599 = vsel %vm594, %v591, 0
    %v601 = vsel %vm594, %v593, 0
    %vm603 = vcmask 1043456
    %v605 = vsel %vm603, %v68, 0
    %607 = vmatprep.subr.mxu0 0.0
    %608 = vmatpush1.msra.mxu0 0.0
    %609 = vmatprep.subr.mxu0 0.0
    %610 = vmatpush1.msra.mxu0 0.0
    %611 = vmatprep.subr.mxu0 0.0
    %612 = vmatpush1.msra.mxu0 0.0
    %613 = vmatprep.subr.mxu0 0.0
    %614 = vmatpush1.msra.mxu0 0.0
    %615 = vmatprep.subr.mxu0 0.0
    %616 = vmatpush1.msra.mxu0 0.0
    %617 = vmatprep.subr.mxu0 0.0
    %618 = vmatpush1.msra.mxu0 0.0
    %619 = vmatprep.subr.mxu0 0.0
    %620 = vmatpush1.msra.mxu0 0.0
    %621 = vmatprep.subr.mxu0 0.0
    %622 = vmatpush1.msra.mxu0 0.0
    %623 = vmatprep.subr.mxu0 0.0
    %624 = vmatpush1.msra.mxu0 0.0
    %625 = vmatprep.subr.mxu0 0.0
    %626 = vmatpush1.msra.mxu0 0.0
    %627 = vmatprep.subr.mxu0 0.0
    %628 = vmatpush1.msra.mxu0 0.0
    %629 = vmatprep.subr.mxu0 0.0
    %630 = vmatpush1.msra.mxu0 0.0
    %631 = vmatprep.subr.mxu0 0.0
    %632 = vmatpush1.msra.mxu0 0.0
    %633 = vmatprep.subr.mxu0 0.0
    %634 = vmatpush1.msra.mxu0 0.0
    %635 = vmatprep.subr.mxu0 0.0
    %636 = vmatpush1.msra.mxu0 0.0
    %637 = vmatprep.subr.mxu0 0.0
    %638 = vmatpush1.msra.mxu0 %v605
    %639 = vmatprep.subr.mxu0 0.0
    %640 = vmatpush2.msra.mxu0 0.0
    %641 = vmatprep.subr.mxu0 0.0
    %642 = vmatpush2.msra.mxu0 0.0
    %643 = vmatprep.subr.mxu0 0.0
    %644 = vmatpush2.msra.mxu0 0.0
    %645 = vmatprep.subr.mxu0 0.0
    %646 = vmatpush2.msra.mxu0 0.0
    %647 = vmatprep.subr.mxu0 0.0
    %648 = vmatpush2.msra.mxu0 0.0
    %649 = vmatprep.subr.mxu0 0.0
    %650 = vmatpush2.msra.mxu0 0.0
    %651 = vmatprep.subr.mxu0 0.0
    %652 = vmatpush2.msra.mxu0 0.0
    %653 = vmatprep.subr.mxu0 0.0
    %654 = vmatpush2.msra.mxu0 0.0
    %655 = vmatprep.subr.mxu0 0.0
    %656 = vmatpush2.msra.mxu0 0.0
    %657 = vmatprep.subr.mxu0 0.0
    %658 = vmatpush2.msra.mxu0 0.0
    %659 = vmatprep.subr.mxu0 0.0
    %660 = vmatpush2.msra.mxu0 0.0
    %661 = vmatprep.subr.mxu0 0.0
    %662 = vmatpush2.msra.mxu0 0.0
    %663 = vmatprep.subr.mxu0 0.0
    %664 = vmatpush2.msra.mxu0 0.0
    %665 = vmatprep.subr.mxu0 0.0
    %666 = vmatpush2.msra.mxu0 0.0
    %667 = vmatprep.subr.mxu0 0.0
    %668 = vmatpush2.msra.mxu0 0.0
    %669 = vmatprep.subr.mxu0 0.0
    %670 = vmatpush2.msra.mxu0 0.0
    %671 = vmatprep.mubr.f32.mxu0 0.0
    %672 = vmatmul.mubr.f32.gmra.mxu0 %v595
    %v673 = vpop.f32.mrf.mxu0
    %v674 = vadd.f32 0.0, %v673
    %v675 = vpop.f32.mrf.mxu0
    %676 = vmatprep.mubr.f32.mxu0 0.0
    %677 = vmatmul.mubr.f32.gmra.mxu0 %v597
    %v678 = vpop.f32.mrf.mxu0
    %v679 = vadd.f32 0.0, %v678
    %v680 = vpop.f32.mrf.mxu0
    %681 = vmatprep.mubr.f32.mxu0 0.0
    %682 = vmatmul.mubr.f32.gmra.mxu0 %v599
    %v683 = vpop.f32.mrf.mxu0
    %v684 = vadd.f32 0.0, %v683
    %v685 = vpop.f32.mrf.mxu0
    %686 = vmatprep.mubr.f32.mxu0 0.0
    %687 = vmatmul.mubr.f32.gmra.mxu0 %v601
    %v688 = vpop.f32.mrf.mxu0
    %v689 = vadd.f32 0.0, %v688
    %v690 = vpop.f32.mrf.mxu0
    %691 = vdwg.mxu0
    %v693 = vsel %vm122, %v70, 0
    %v696 = vsel %vm122, %v71, 0
    %v699 = vsel %vm122, %v72, 0
    %v702 = vsel %vm122, %v73, 0
    %704 = vmatprep.subr.mxu0 0.0
    %705 = vmatpush1.msra.mxu0 0.0
    %706 = vmatprep.subr.mxu0 0.0
    %707 = vmatpush1.msra.mxu0 0.0
    %708 = vmatprep.subr.mxu0 0.0
    %709 = vmatpush1.msra.mxu0 0.0
    %710 = vmatprep.subr.mxu0 0.0
    %711 = vmatpush1.msra.mxu0 0.0
    %712 = vmatprep.subr.mxu0 0.0
    %713 = vmatpush1.msra.mxu0 0.0
    %714 = vmatprep.subr.mxu0 0.0
    %715 = vmatpush1.msra.mxu0 0.0
    %716 = vmatprep.subr.mxu0 0.0
    %717 = vmatpush1.msra.mxu0 0.0
    %718 = vmatprep.subr.mxu0 0.0
    %719 = vmatpush1.msra.mxu0 0.0
    %720 = vmatprep.subr.mxu0 0.0
    %721 = vmatpush1.msra.mxu0 0.0
    %722 = vmatprep.subr.mxu0 0.0
    %723 = vmatpush1.msra.mxu0 0.0
    %724 = vmatprep.subr.mxu0 0.0
    %725 = vmatpush1.msra.mxu0 0.0
    %726 = vmatprep.subr.mxu0 0.0
    %727 = vmatpush1.msra.mxu0 0.0
    %728 = vmatprep.subr.mxu0 0.0
    %729 = vmatpush1.msra.mxu0 %v689
    %730 = vmatprep.subr.mxu0 0.0
    %731 = vmatpush1.msra.mxu0 %v684
    %732 = vmatprep.subr.mxu0 0.0
    %733 = vmatpush1.msra.mxu0 %v679
    %734 = vmatprep.subr.mxu0 0.0
    %735 = vmatpush1.msra.mxu0 %v674
    %736 = vmatprep.subr.mxu0 0.0
    %737 = vmatpush2.msra.mxu0 0.0
    %738 = vmatprep.subr.mxu0 0.0
    %739 = vmatpush2.msra.mxu0 0.0
    %740 = vmatprep.subr.mxu0 0.0
    %741 = vmatpush2.msra.mxu0 0.0
    %742 = vmatprep.subr.mxu0 0.0
    %743 = vmatpush2.msra.mxu0 0.0
    %744 = vmatprep.subr.mxu0 0.0
    %745 = vmatpush2.msra.mxu0 0.0
    %746 = vmatprep.subr.mxu0 0.0
    %747 = vmatpush2.msra.mxu0 0.0
    %748 = vmatprep.subr.mxu0 0.0
    %749 = vmatpush2.msra.mxu0 0.0
    %750 = vmatprep.subr.mxu0 0.0
    %751 = vmatpush2.msra.mxu0 0.0
    %752 = vmatprep.subr.mxu0 0.0
    %753 = vmatpush2.msra.mxu0 0.0
    %754 = vmatprep.subr.mxu0 0.0
    %755 = vmatpush2.msra.mxu0 0.0
    %756 = vmatprep.subr.mxu0 0.0
    %757 = vmatpush2.msra.mxu0 0.0
    %758 = vmatprep.subr.mxu0 0.0
    %759 = vmatpush2.msra.mxu0 0.0
    %760 = vmatprep.subr.mxu0 0.0
    %761 = vmatpush2.msra.mxu0 0.0
    %762 = vmatprep.subr.mxu0 0.0
    %763 = vmatpush2.msra.mxu0 0.0
    %764 = vmatprep.subr.mxu0 0.0
    %765 = vmatpush2.msra.mxu0 0.0
    %766 = vmatprep.subr.mxu0 0.0
    %767 = vmatpush2.msra.mxu0 0.0
    %768 = vmatprep.mubr.f32.mxu0 0.0
    %769 = vmatmul.mubr.f32.gmra.mxu0 %v693
    %v770 = vpop.f32.mrf.mxu0
    %v771 = vadd.f32 0.0, %v770
    %v772 = vpop.f32.mrf.mxu0
    %773 = vmatprep.mubr.f32.mxu0 0.0
    %774 = vmatmul.mubr.f32.gmra.mxu0 %v696
    %v775 = vpop.f32.mrf.mxu0
    %v776 = vadd.f32 0.0, %v775
    %v777 = vpop.f32.mrf.mxu0
    %778 = vmatprep.mubr.f32.mxu0 0.0
    %779 = vmatmul.mubr.f32.gmra.mxu0 %v699
    %v780 = vpop.f32.mrf.mxu0
    %v781 = vadd.f32 0.0, %v780
    %v782 = vpop.f32.mrf.mxu0
    %783 = vmatprep.mubr.f32.mxu0 0.0
    %784 = vmatmul.mubr.f32.gmra.mxu0 %v702
    %v785 = vpop.f32.mrf.mxu0
    %v786 = vadd.f32 0.0, %v785
    %v787 = vpop.f32.mrf.mxu0
    %788 = vdwg.mxu0
    %v789 = vmul.f32 %v78, %v674
    %v790 = vmul.f32 %v79, %v679
    %v791 = vmul.f32 %v80, %v684
    %v792 = vmul.f32 %v81, %v689
    %v793 = vadd.f32 %v789, %v790
    %v794 = vadd.f32 %v793, %v791
    %v795 = vadd.f32 %v794, %v792
    %v796 = vrot.slane %v795, 4
    %v797 = vadd.f32 %v795, %v796
    %v798 = vrot.slane %v797, 2
    %v799 = vadd.f32 %v797, %v798
    %v800 = vrot.slane %v799, 1
    %v801 = vadd.f32 %v799, %v800
    %vm802 = vcmp.gt.f32.partialorder %v74, 0.5
    %vm803 = vcmp.gt.f32.partialorder %v75, 0.5
    %vm804 = vcmp.gt.f32.partialorder %v76, 0.5
    %vm805 = vcmp.gt.f32.partialorder %v77, 0.5
    %v806 = vsub.f32 %v771, %v801
    %v807 = vsub.f32 %v776, %v801
    %v808 = vsub.f32 %v781, %v801
    %v809 = vsub.f32 %v786, %v801
    %v810 = vsel %vm802, %v806, 0.0
    %v811 = vsel %vm803, %v807, 0.0
    %v812 = vsel %vm804, %v808, 0.0
    %v813 = vsel %vm805, %v809, 0.0
    %v814 = vmul.f32 %v810, 1.442695
    %v815 = vpow.pop %v814
    %v816 = vmul.f32 %v811, 1.442695
    %v817 = vpow.pop %v816
    %v818 = vmul.f32 %v812, 1.442695
    %v819 = vpow.pop %v818
    %v820 = vmul.f32 %v813, 1.442695
    %v821 = vpow.pop %v820
    %v822 = vpack.c.bf16 %v483, %v482
    %v823 = vpack.c.bf16 %v485, %v484
    %826 = vrot.lane.b32.xlu0 %v822, 48
    %v827 = vpop.permute.xlu0 %826
    %828 = vrot.lane.b32.xlu0 %v823, 48
    %v829 = vpop.permute.xlu0 %828
    %830 = vrot.lane.b32.xlu0 %v822, 64
    %v831 = vpop.permute.xlu0 %830
    %832 = vrot.lane.b32.xlu0 %v823, 64
    %v833 = vpop.permute.xlu0 %832
    %vm834 = vcmask 130048
    %v836 = vsel %vm834, %v827, 0
    %v839 = vsel %vm834, %v829, 0
    %v842 = vsel %vm834, %v831, 0
    %v845 = vsel %vm834, %v833, 0
    %847 = vmatprep.subr.bf16.mxu0 0
    %848 = vmatpush1.bf16.xpose.msra.mxu0 0
    %849 = vmatprep.subr.bf16.mxu0 0
    %850 = vmatpush1.bf16.xpose.msra.mxu0 0
    %851 = vmatprep.subr.bf16.mxu0 0
    %852 = vmatpush1.bf16.xpose.msra.mxu0 0
    %853 = vmatprep.subr.bf16.mxu0 0
    %854 = vmatpush1.bf16.xpose.msra.mxu0 0
    %855 = vmatprep.subr.bf16.mxu0 0
    %856 = vmatpush1.bf16.xpose.msra.mxu0 0
    %857 = vmatprep.subr.bf16.mxu0 0
    %858 = vmatpush1.bf16.xpose.msra.mxu0 0
    %859 = vmatprep.subr.bf16.mxu0 0
    %860 = vmatpush1.bf16.xpose.msra.mxu0 %v845
    %861 = vmatprep.subr.bf16.mxu0 0
    %862 = vmatpush1.bf16.xpose.msra.mxu0 %v842
    %863 = vmatprep.subr.bf16.mxu0 0
    %864 = vmatpush2.bf16.xpose.msra.mxu0 0
    %865 = vmatprep.subr.bf16.mxu0 0
    %866 = vmatpush2.bf16.xpose.msra.mxu0 0
    %867 = vmatprep.subr.bf16.mxu0 0
    %868 = vmatpush2.bf16.xpose.msra.mxu0 0
    %869 = vmatprep.subr.bf16.mxu0 0
    %870 = vmatpush2.bf16.xpose.msra.mxu0 0
    %871 = vmatprep.subr.bf16.mxu0 0
    %872 = vmatpush2.bf16.xpose.msra.mxu0 0
    %873 = vmatprep.subr.bf16.mxu0 0
    %874 = vmatpush2.bf16.xpose.msra.mxu0 0
    %875 = vmatprep.subr.bf16.mxu0 0
    %876 = vmatpush2.bf16.xpose.msra.mxu0 0
    %877 = vmatprep.subr.bf16.mxu0 0
    %878 = vmatpush2.bf16.xpose.msra.mxu0 0
    %879 = vmatprep.mubr.bf16.mxu0 0
    %880 = vmatmul.mubr.bf16.gmra.mxu0 %v836
    %v881 = vpop.f32.mrf.mxu0
    %v882 = vadd.f32 0.0, %v881
    %v883 = vpop.f32.mrf.mxu0
    %v884 = vpop.f32.mrf.mxu0
    %v885 = vadd.f32 0.0, %v884
    %v886 = vpop.f32.mrf.mxu0
    %887 = vmatprep.mubr.bf16.mxu0 0
    %888 = vmatmul.mubr.bf16.gmra.mxu0 %v839
    %v889 = vpop.f32.mrf.mxu0
    %v890 = vadd.f32 0.0, %v889
    %v891 = vpop.f32.mrf.mxu0
    %v892 = vpop.f32.mrf.mxu0
    %v893 = vadd.f32 0.0, %v892
    %v894 = vpop.f32.mrf.mxu0
    %895 = vdwg.mxu0
    %900 = vrot.lane.b32.xlu0 %v882, 32
    %v901 = vpop.permute.xlu0 %900
    %902 = vrot.lane.b32.xlu0 %v885, 32
    %v903 = vpop.permute.xlu0 %902
    %904 = vrot.lane.b32.xlu0 %v890, 32
    %v905 = vpop.permute.xlu0 %904
    %906 = vrot.lane.b32.xlu0 %v893, 32
    %v907 = vpop.permute.xlu0 %906
    %912 = vrot.lane.b32.xlu0 %v882, 64
    %v913 = vpop.permute.xlu0 %912
    %914 = vrot.lane.b32.xlu0 %v885, 64
    %v915 = vpop.permute.xlu0 %914
    %916 = vrot.lane.b32.xlu0 %v890, 64
    %v917 = vpop.permute.xlu0 %916
    %918 = vrot.lane.b32.xlu0 %v893, 64
    %v919 = vpop.permute.xlu0 %918
    %924 = vrot.lane.b32.xlu0 %v882, 96
    %v925 = vpop.permute.xlu0 %924
    %926 = vrot.lane.b32.xlu0 %v885, 96
    %v927 = vpop.permute.xlu0 %926
    %928 = vrot.lane.b32.xlu0 %v890, 96
    %v929 = vpop.permute.xlu0 %928
    %930 = vrot.lane.b32.xlu0 %v893, 96
    %v931 = vpop.permute.xlu0 %930
    %v936 = vsel %vm122, %v882, %v901
    %v937 = vsel %vm122, %v885, %v903
    %v938 = vsel %vm122, %v890, %v905
    %v939 = vsel %vm122, %v893, %v907
    %vm940 = vcmask 523264
    %v941 = vsel %vm940, %v936, %v913
    %v942 = vsel %vm940, %v937, %v915
    %v943 = vsel %vm940, %v938, %v917
    %v944 = vsel %vm940, %v939, %v919
    %vm945 = vcmask 785408
    %v946 = vsel %vm945, %v941, %v925
    %v947 = vsel %vm945, %v942, %v927
    %v948 = vsel %vm945, %v943, %v929
    %v949 = vsel %vm945, %v944, %v931
    %v950 = vmul.f32 %v946, %v815
    %v951 = vmul.f32 %v947, %v817
    %v952 = vmul.f32 %v948, %v819
    %v953 = vmul.f32 %v949, %v821
    %v954 = vsel %vm802, %v950, 0.0
    %v955 = vsel %vm803, %v951, 0.0
    %v956 = vsel %vm804, %v952, 0.0
    %v957 = vsel %vm805, %v953, 0.0
    %962 = vrot.lane.b32.xlu0 %v566, 64
    %v963 = vpop.permute.xlu0 %962
    %964 = vrot.lane.b32.xlu0 %v567, 64
    %v965 = vpop.permute.xlu0 %964
    %966 = vrot.lane.b32.xlu0 %v568, 64
    %v967 = vpop.permute.xlu0 %966
    %968 = vrot.lane.b32.xlu0 %v569, 64
    %v969 = vpop.permute.xlu0 %968
    %v970 = vsel %vm594, %v963, 0
    %v972 = vsel %vm594, %v965, 0
    %v974 = vsel %vm594, %v967, 0
    %v976 = vsel %vm594, %v969, 0
    %v979 = vsel %vm603, %v69, 0
    %981 = vmatprep.subr.mxu0 0.0
    %982 = vmatpush1.msra.mxu0 0.0
    %983 = vmatprep.subr.mxu0 0.0
    %984 = vmatpush1.msra.mxu0 0.0
    %985 = vmatprep.subr.mxu0 0.0
    %986 = vmatpush1.msra.mxu0 0.0
    %987 = vmatprep.subr.mxu0 0.0
    %988 = vmatpush1.msra.mxu0 0.0
    %989 = vmatprep.subr.mxu0 0.0
    %990 = vmatpush1.msra.mxu0 0.0
    %991 = vmatprep.subr.mxu0 0.0
    %992 = vmatpush1.msra.mxu0 0.0
    %993 = vmatprep.subr.mxu0 0.0
    %994 = vmatpush1.msra.mxu0 0.0
    %995 = vmatprep.subr.mxu0 0.0
    %996 = vmatpush1.msra.mxu0 0.0
    %997 = vmatprep.subr.mxu0 0.0
    %998 = vmatpush1.msra.mxu0 0.0
    %999 = vmatprep.subr.mxu0 0.0
    %1000 = vmatpush1.msra.mxu0 0.0
    %1001 = vmatprep.subr.mxu0 0.0
    %1002 = vmatpush1.msra.mxu0 0.0
    %1003 = vmatprep.subr.mxu0 0.0
    %1004 = vmatpush1.msra.mxu0 0.0
    %1005 = vmatprep.subr.mxu0 0.0
    %1006 = vmatpush1.msra.mxu0 0.0
    %1007 = vmatprep.subr.mxu0 0.0
    %1008 = vmatpush1.msra.mxu0 0.0
    %1009 = vmatprep.subr.mxu0 0.0
    %1010 = vmatpush1.msra.mxu0 0.0
    %1011 = vmatprep.subr.mxu0 0.0
    %1012 = vmatpush1.msra.mxu0 %v979
    %1013 = vmatprep.subr.mxu0 0.0
    %1014 = vmatpush2.msra.mxu0 0.0
    %1015 = vmatprep.subr.mxu0 0.0
    %1016 = vmatpush2.msra.mxu0 0.0
    %1017 = vmatprep.subr.mxu0 0.0
    %1018 = vmatpush2.msra.mxu0 0.0
    %1019 = vmatprep.subr.mxu0 0.0
    %1020 = vmatpush2.msra.mxu0 0.0
    %1021 = vmatprep.subr.mxu0 0.0
    %1022 = vmatpush2.msra.mxu0 0.0
    %1023 = vmatprep.subr.mxu0 0.0
    %1024 = vmatpush2.msra.mxu0 0.0
    %1025 = vmatprep.subr.mxu0 0.0
    %1026 = vmatpush2.msra.mxu0 0.0
    %1027 = vmatprep.subr.mxu0 0.0
    %1028 = vmatpush2.msra.mxu0 0.0
    %1029 = vmatprep.subr.mxu0 0.0
    %1030 = vmatpush2.msra.mxu0 0.0
    %1031 = vmatprep.subr.mxu0 0.0
    %1032 = vmatpush2.msra.mxu0 0.0
    %1033 = vmatprep.subr.mxu0 0.0
    %1034 = vmatpush2.msra.mxu0 0.0
    %1035 = vmatprep.subr.mxu0 0.0
    %1036 = vmatpush2.msra.mxu0 0.0
    %1037 = vmatprep.subr.mxu0 0.0
    %1038 = vmatpush2.msra.mxu0 0.0
    %1039 = vmatprep.subr.mxu0 0.0
    %1040 = vmatpush2.msra.mxu0 0.0
    %1041 = vmatprep.subr.mxu0 0.0
    %1042 = vmatpush2.msra.mxu0 0.0
    %1043 = vmatprep.subr.mxu0 0.0
    %1044 = vmatpush2.msra.mxu0 0.0
    %1045 = vmatprep.mubr.f32.mxu0 0.0
    %1046 = vmatmul.mubr.f32.gmra.mxu0 %v970
    %v1047 = vpop.f32.mrf.mxu0
    %v1048 = vadd.f32 0.0, %v1047
    %v1049 = vpop.f32.mrf.mxu0
    %1050 = vmatprep.mubr.f32.mxu0 0.0
    %1051 = vmatmul.mubr.f32.gmra.mxu0 %v972
    %v1052 = vpop.f32.mrf.mxu0
    %v1053 = vadd.f32 0.0, %v1052
    %v1054 = vpop.f32.mrf.mxu0
    %1055 = vmatprep.mubr.f32.mxu0 0.0
    %1056 = vmatmul.mubr.f32.gmra.mxu0 %v974
    %v1057 = vpop.f32.mrf.mxu0
    %v1058 = vadd.f32 0.0, %v1057
    %v1059 = vpop.f32.mrf.mxu0
    %1060 = vmatprep.mubr.f32.mxu0 0.0
    %1061 = vmatmul.mubr.f32.gmra.mxu0 %v976
    %v1062 = vpop.f32.mrf.mxu0
    %v1063 = vadd.f32 0.0, %v1062
    %v1064 = vpop.f32.mrf.mxu0
    %1065 = vdwg.mxu0
    %v1066 = vmul.f32 %v482, %v1048
    %v1067 = vmul.f32 %v483, %v1053
    %v1068 = vmul.f32 %v484, %v1058
    %v1069 = vmul.f32 %v485, %v1063
    %v1070 = vmul.f32 %v94, %v1066
    %v1071 = vmul.f32 %v95, %v1067
    %v1072 = vmul.f32 %v96, %v1068
    %v1073 = vmul.f32 %v97, %v1069
    %v1074 = vmul.f32 %v98, %v1066
    %v1075 = vmul.f32 %v99, %v1067
    %v1076 = vmul.f32 %v100, %v1068
    %v1077 = vmul.f32 %v101, %v1069
    %v1078 = vmul.f32 %v102, %v1066
    %v1079 = vmul.f32 %v103, %v1067
    %v1080 = vmul.f32 %v104, %v1068
    %v1081 = vmul.f32 %v105, %v1069
    %v1082 = vmul.f32 %v106, %v1066
    %v1083 = vmul.f32 %v107, %v1067
    %v1084 = vmul.f32 %v108, %v1068
    %v1085 = vmul.f32 %v109, %v1069
    %v1086 = vpack.c.bf16 %v955, %v954
    %v1087 = vpack.c.bf16 %v957, %v956
    %v1088 = vpack.c.bf16 %v1071, %v1070
    %v1089 = vpack.c.bf16 %v1073, %v1072
    %v1090 = vpack.c.bf16 %v1075, %v1074
    %v1091 = vpack.c.bf16 %v1077, %v1076
    %v1092 = vpack.c.bf16 %v1079, %v1078
    %v1093 = vpack.c.bf16 %v1081, %v1080
    %v1094 = vpack.c.bf16 %v1083, %v1082
    %v1095 = vpack.c.bf16 %v1085, %v1084
    %v1096 = vlaneseq
    %v1097 = vshrl.u32 %v1096, 7
    %v1098 = vsub.s32 0, %v1097
    %v1099 = vrot.slane %v65, %v1098
    %v1100 = vmul.f32 %v1099, %v482
    %v1101 = vmul.f32 %v1099, %v483
    %v1102 = vmul.f32 %v1099, %v484
    %v1103 = vmul.f32 %v1099, %v485
    %1104 = vmatprep.subr.bf16.mxu0 0
    %1105 = vmatpush1.bf16.msra.mxu0 %v1095
    %1106 = vmatprep.subr.bf16.mxu0 0
    %1107 = vmatpush1.bf16.msra.mxu0 %v1094
    %1108 = vmatprep.subr.bf16.mxu0 0
    %1109 = vmatpush1.bf16.msra.mxu0 %v1093
    %1110 = vmatprep.subr.bf16.mxu0 0
    %1111 = vmatpush1.bf16.msra.mxu0 %v1092
    %1112 = vmatprep.subr.bf16.mxu0 0
    %1113 = vmatpush1.bf16.msra.mxu0 %v1091
    %1114 = vmatprep.subr.bf16.mxu0 0
    %1115 = vmatpush1.bf16.msra.mxu0 %v1090
    %1116 = vmatprep.subr.bf16.mxu0 0
    %1117 = vmatpush1.bf16.msra.mxu0 %v1089
    %1118 = vmatprep.subr.bf16.mxu0 0
    %1119 = vmatpush1.bf16.msra.mxu0 %v1088
    %1120 = vmatprep.subr.bf16.mxu0 0
    %1121 = vmatpush2.bf16.msra.mxu0 0
    %1122 = vmatprep.subr.bf16.mxu0 0
    %1123 = vmatpush2.bf16.msra.mxu0 0
    %1124 = vmatprep.subr.bf16.mxu0 0
    %1125 = vmatpush2.bf16.msra.mxu0 0
    %1126 = vmatprep.subr.bf16.mxu0 0
    %1127 = vmatpush2.bf16.msra.mxu0 0
    %1128 = vmatprep.subr.bf16.mxu0 0
    %1129 = vmatpush2.bf16.msra.mxu0 0
    %1130 = vmatprep.subr.bf16.mxu0 0
    %1131 = vmatpush2.bf16.msra.mxu0 0
    %1132 = vmatprep.subr.bf16.mxu0 0
    %1133 = vmatpush2.bf16.msra.mxu0 0
    %1134 = vmatprep.subr.bf16.mxu0 0
    %1135 = vmatpush2.bf16.msra.mxu0 0
    %1136 = vmatprep.mubr.bf16.mxu0 0
    %1137 = vmatmul.mubr.bf16.gmra.mxu0 %v1086
    %v1138 = vpop.f32.mrf.mxu0
    %v1139 = vadd.f32 %v1100, %v1138
    %v1140 = vpop.f32.mrf.mxu0
    %v1141 = vpop.f32.mrf.mxu0
    %v1142 = vadd.f32 %v1101, %v1141
    %v1143 = vpop.f32.mrf.mxu0
    %1144 = vmatprep.mubr.bf16.mxu0 0
    %1145 = vmatmul.mubr.bf16.gmra.mxu0 %v1087
    %v1146 = vpop.f32.mrf.mxu0
    %v1147 = vadd.f32 %v1102, %v1146
    %v1148 = vpop.f32.mrf.mxu0
    %v1149 = vpop.f32.mrf.mxu0
    %v1150 = vadd.f32 %v1103, %v1149
    %v1151 = vpop.f32.mrf.mxu0
    %1152 = vdwg.mxu0
    %v1153 = vxor.u32 %v227, 2147483648
    %v1154 = vxor.u32 %v231, 2147483648
    %v1155 = vxor.u32 %v237, 2147483648
    %v1156 = vxor.u32 %v241, 2147483648
    %v1157 = vmul.f32 %v1153, 1.442695
    %v1158 = vpow.pop %v1157
    %v1159 = vmul.f32 %v1154, 1.442695
    %v1160 = vpow.pop %v1159
    %v1161 = vmul.f32 %v1155, 1.442695
    %v1162 = vpow.pop %v1161
    %v1163 = vmul.f32 %v1156, 1.442695
    %v1164 = vpow.pop %v1163
    %v1165 = vadd.f32 %v1158, 1.0
    %v1166 = vadd.f32 %v1160, 1.0
    %v1167 = vadd.f32 %v1162, 1.0
    %v1168 = vadd.f32 %v1164, 1.0
    %v1169 = vrcp.pop %v1165
    %v1170 = vmul.f32 1.0, %v1169
    %v1171 = vrcp.pop %v1166
    %v1172 = vmul.f32 1.0, %v1171
    %v1173 = vrcp.pop %v1167
    %v1174 = vmul.f32 1.0, %v1173
    %v1175 = vrcp.pop %v1168
    %v1176 = vmul.f32 1.0, %v1175
    %v1177 = vmul.f32 %v227, %v1170
    %v1178 = vmul.f32 %v231, %v1172
    %v1179 = vmul.f32 %v237, %v1174
    %v1180 = vmul.f32 %v241, %v1176
    %v1181 = vmul.f32 %v1139, %v1177
    %v1182 = vmul.f32 %v1142, %v1178
    %v1183 = vmul.f32 %v1147, %v1179
    %v1184 = vmul.f32 %v1150, %v1180
    %v1185 = vmul.f32 %v1181, %v1181
    %v1186 = vmul.f32 %v1182, %v1182
    %v1187 = vmul.f32 %v1183, %v1183
    %v1188 = vmul.f32 %v1184, %v1184
    %v1189 = vsel %vm940, %v1185, 0.0
    %1190 = vadd.xlane.f32.xlu0 %v1189
    %v1191 = vpop.xlane.xlu0 %1190
    %v1192 = vsel %vm940, %v1186, 0.0
    %1193 = vadd.xlane.f32.xlu0 %v1192
    %v1194 = vpop.xlane.xlu0 %1193
    %v1195 = vsel %vm940, %v1187, 0.0
    %1196 = vadd.xlane.f32.xlu0 %v1195
    %v1197 = vpop.xlane.xlu0 %1196
    %v1198 = vsel %vm940, %v1188, 0.0
    %1199 = vadd.xlane.f32.xlu0 %v1198
    %v1200 = vpop.xlane.xlu0 %1199
    %v1201 = vrcp.pop 64.0
    %v1202 = vmul.f32 %v1191, %v1201
    %v1203 = vmul.f32 %v1194, %v1201
    %v1204 = vmul.f32 %v1197, %v1201
    %v1205 = vmul.f32 %v1200, %v1201
    %v1206 = vadd.f32 %v1202, 1e-05
    %v1207 = vadd.f32 %v1203, 1e-05
    %v1208 = vadd.f32 %v1204, 1e-05
    %v1209 = vadd.f32 %v1205, 1e-05
    %v1210 = vrsqrt.pop %v1206
    %v1211 = vrsqrt.pop %v1207
    %v1212 = vrsqrt.pop %v1208
    %v1213 = vrsqrt.pop %v1209
    %v1214 = vmul.f32 %v1181, %v1210
    %v1215 = vmul.f32 %v1182, %v1211
    %v1216 = vmul.f32 %v1183, %v1212
    %v1217 = vmul.f32 %v1184, %v1213
    %v1218 = vlaneseq
    %v1219 = vshrl.u32 %v1218, 7
    %v1220 = vsub.s32 0, %v1219
    %v1221 = vrot.slane %v66, %v1220
    %v1222 = vmul.f32 %v1221, %v1214
    %v1223 = vmul.f32 %v1221, %v1215
    %v1224 = vmul.f32 %v1221, %v1216
    %v1225 = vmul.f32 %v1221, %v1217
    %v1226 = vpack.c.bf16 %v1223, %v1222
    %v1227 = vpack.c.bf16 %v1225, %v1224
    %v1228 = vpack.c.bf16 %v111, %v110
    %v1229 = vpack.c.bf16 %v113, %v112
    %v1230 = vpack.c.bf16 %v115, %v114
    %v1231 = vpack.c.bf16 %v117, %v116
    %v1233 = vsel %vm940, %v1226, 0
    %v1236 = vsel %vm940, %v1227, 0
    %1238 = vmatprep.subr.bf16.mxu0 0
    %1239 = vmatpush1.bf16.msra.mxu0 0
    %1240 = vmatprep.subr.bf16.mxu0 0
    %1241 = vmatpush1.bf16.msra.mxu0 0
    %1242 = vmatprep.subr.bf16.mxu0 0
    %1243 = vmatpush1.bf16.msra.mxu0 0
    %1244 = vmatprep.subr.bf16.mxu0 0
    %1245 = vmatpush1.bf16.msra.mxu0 0
    %1246 = vmatprep.subr.bf16.mxu0 0
    %1247 = vmatpush1.bf16.msra.mxu0 %v1231
    %1248 = vmatprep.subr.bf16.mxu0 0
    %1249 = vmatpush1.bf16.msra.mxu0 %v1230
    %1250 = vmatprep.subr.bf16.mxu0 0
    %1251 = vmatpush1.bf16.msra.mxu0 %v1229
    %1252 = vmatprep.subr.bf16.mxu0 0
    %1253 = vmatpush1.bf16.msra.mxu0 %v1228
    %1254 = vmatprep.subr.bf16.mxu0 0
    %1255 = vmatpush2.bf16.msra.mxu0 0
    %1256 = vmatprep.subr.bf16.mxu0 0
    %1257 = vmatpush2.bf16.msra.mxu0 0
    %1258 = vmatprep.subr.bf16.mxu0 0
    %1259 = vmatpush2.bf16.msra.mxu0 0
    %1260 = vmatprep.subr.bf16.mxu0 0
    %1261 = vmatpush2.bf16.msra.mxu0 0
    %1262 = vmatprep.subr.bf16.mxu0 0
    %1263 = vmatpush2.bf16.msra.mxu0 0
    %1264 = vmatprep.subr.bf16.mxu0 0
    %1265 = vmatpush2.bf16.msra.mxu0 0
    %1266 = vmatprep.subr.bf16.mxu0 0
    %1267 = vmatpush2.bf16.msra.mxu0 0
    %1268 = vmatprep.subr.bf16.mxu0 0
    %1269 = vmatpush2.bf16.msra.mxu0 0
    %1270 = vmatprep.mubr.bf16.mxu0 0
    %1271 = vmatmul.mubr.bf16.gmra.mxu0 %v1233
    %v1272 = vpop.f32.mrf.mxu0
    %v1273 = vadd.f32 0.0, %v1272
    %v1274 = vpop.f32.mrf.mxu0
    %v1275 = vpop.f32.mrf.mxu0
    %v1276 = vadd.f32 0.0, %v1275
    %v1277 = vpop.f32.mrf.mxu0
    %1278 = vmatprep.mubr.bf16.mxu0 0
    %1279 = vmatmul.mubr.bf16.gmra.mxu0 %v1236
    %v1280 = vpop.f32.mrf.mxu0
    %v1281 = vadd.f32 0.0, %v1280
    %v1282 = vpop.f32.mrf.mxu0
    %v1283 = vpop.f32.mrf.mxu0
    %v1284 = vadd.f32 0.0, %v1283
    %v1285 = vpop.f32.mrf.mxu0
    %1286 = vdwg.mxu0
    %v1287 = vadd.f32 %v57, %v1273
    %v1288 = vadd.f32 %v58, %v1276
    %v1289 = vadd.f32 %v59, %v1281
    %v1290 = vadd.f32 %v60, %v1284
    %1291 = vst.msk [vmem:[#allocation8] sm:$0xff] %vm122, %v1287
    %1292 = vst.msk [vmem:[#allocation8 + $0x8] sm:$0xff] %vm122, %v1288
    %1293 = vst.msk [vmem:[#allocation8 + $0x10] sm:$0xff] %vm122, %v1289
    %1294 = vst.msk [vmem:[#allocation8 + $0x18] sm:$0xff] %vm122, %v1290
    // Predicated region
    $region26: #{tpu_custom_call.1} parent=1 // pred_check
      _
    $region27: #{tpu_custom_call.1} parent=1 // pred_check_branch
      %1296 = sbr.rel (0) target = $region29
    $region28: #{tpu_custom_call.1} parent=1 // pred_region
      %s1298 = ssub.s32 512, 512
      %1299 = vsyncadd [#allocation4], %s1298
      %s1300 = sshll.u32 [#allocation8], 4
      %s1301 = int_to_ptr.vmem [resolvable:$true] %s1300
      %1306 = dma.vmem_to_hbm [thread:$0]  %s1301, 512, %s3, [#allocation4], 128, 128, 8
    $region29: #{tpu_custom_call.1} parent=1 // pred_fallthru
      _
    // Predicated region
    $region30: #{tpu_custom_call.1} parent=1 // pred_check
      _
    $region31: #{tpu_custom_call.1} parent=1 // pred_check_branch
      %1308 = sbr.rel (0) target = $region33
    $region32: #{tpu_custom_call.1} parent=1 // pred_region
      %1309 = dma.done [#allocation4], 512
    $region33: #{tpu_custom_call.1} parent=1 // pred_fallthru
      _
    %1310 = vsyncpa [#allocation3], 1
    %1311 = vsyncpa [#allocation6], 1
    %1312 = vsyncpa [#allocation4], 1

</llo_original>
